<compile_context>
chip_gen: v6e
topology: v6e:2x2x1
jax: 0.10.0
libtpu: 0.0.40
codegen_flags: <defaults>
</compile_context>

<pallas_src>
import jax
import jax.numpy as jnp
from jax import lax
from jax.experimental import pallas as pl
from jax.experimental.pallas import tpu as pltpu
import numpy as np


# ---------------------------------------------------------------------------
# Kernel 1: hoisted input projection  gates_in = x @ W_ih + b  (one big matmul)
# ---------------------------------------------------------------------------
def _inproj_kernel(x_ref, w_ref, b_ref, o_ref):
    o_ref[...] = (jnp.dot(x_ref[...], w_ref[...],
                          preferred_element_type=jnp.float32)
                  + b_ref[...])


def _input_projection(x_bf16, w_ih_bf16, b_f32):
    rows, Ep = x_bf16.shape
    G4 = w_ih_bf16.shape[1]
    TM = rows if rows <= 256 else 256
    grid = (pl.cdiv(rows, TM),)
    return pl.pallas_call(
        _inproj_kernel,
        out_shape=jax.ShapeDtypeStruct((rows, G4), jnp.float32),
        grid_spec=pltpu.PrefetchScalarGridSpec(
            num_scalar_prefetch=0,
            grid=grid,
            in_specs=[
                pl.BlockSpec((TM, Ep), lambda i: (i, 0)),
                pl.BlockSpec((Ep, G4), lambda i: (0, 0)),
                pl.BlockSpec((1, G4), lambda i: (0, 0)),
            ],
            out_specs=pl.BlockSpec((TM, G4), lambda i: (i, 0)),
        ),
        compiler_params=pltpu.CompilerParams(
            dimension_semantics=("parallel",),
            vmem_limit_bytes=32 * 1024 * 1024),
    )(x_bf16, w_ih_bf16, b_f32)


# ---------------------------------------------------------------------------
# Kernel 2: LSTM recurrence + output projection + masked NLL / accuracy
# grid = (batch_tiles [parallel], T [arbitrary])
# ---------------------------------------------------------------------------
def _s2s_recurrence_kernel(gin_ref, tgt_ref, h0_ref, w_hh_ref, w_out_ref, b_out_ref,
                           nll_ref, hit_ref, cnt_ref,
                           h_ref, c_ref):
    t = pl.program_id(1)
    n_t = pl.num_programs(1)
    Bt, Hp = h_ref.shape
    Vp = w_out_ref.shape[1]

    @pl.when(t == 0)
    def _init():
        h_ref[...] = h0_ref[...]
        c_ref[...] = h0_ref[...]
        nll_ref[...] = jnp.zeros_like(nll_ref)
        hit_ref[...] = jnp.zeros_like(hit_ref)
        cnt_ref[...] = jnp.zeros_like(cnt_ref)

    h = h_ref[...]
    c = c_ref[...]

    # Recurrent projection only (input projection was hoisted & streamed in).
    # bf16 operands, f32 accumulation on the MXU; gate math in f32.
    gates = gin_ref[0] + jnp.dot(h.astype(jnp.bfloat16), w_hh_ref[...],
                                 preferred_element_type=jnp.float32)   # (Bt, 4Hp)

    # Hp is a multiple of 128 -> lane-aligned (free) slices.
    i_g = jax.nn.sigmoid(gates[:, 0 * Hp:1 * Hp])
    f_g = jax.nn.sigmoid(gates[:, 1 * Hp:2 * Hp])
    g_g = jnp.tanh(gates[:, 2 * Hp:3 * Hp])
    o_g = jax.nn.sigmoid(gates[:, 3 * Hp:4 * Hp])

    c_new = f_g * c + i_g * g_g
    h_new = o_g * jnp.tanh(c_new)
    h_ref[...] = h_new
    c_ref[...] = c_new

    # Output projection (bf16 x bf16 -> f32) + fused log-softmax NLL / argmax hit.
    logits = (jnp.dot(h_new.astype(jnp.bfloat16), w_out_ref[...],
                      preferred_element_type=jnp.float32)
              + b_out_ref[...])                                        # (Bt, Vp) f32

    tgt_t = tgt_ref[0]                                   # (Bt, 1) int32
    mask = (tgt_t > 0).astype(jnp.float32)               # (Bt, 1)
    lane = lax.broadcasted_iota(jnp.int32, (Bt, Vp), 1)
    onehot = lane == tgt_t                               # (Bt, Vp) bool

    # nll = logsumexp(logits) - logits[target]  (no logp materialization)
    m = jnp.max(logits, axis=-1, keepdims=True)
    lse = m + jnp.log(jnp.sum(jnp.exp(logits - m), axis=-1, keepdims=True))
    tgt_logit = jnp.sum(jnp.where(onehot, logits, 0.0), axis=-1, keepdims=True)
    nll = lse - tgt_logit                                # (Bt, 1)

    # first-index argmax via iota + min (same tie semantics as torch/jnp argmax)
    pred = jnp.min(jnp.where(logits == m, lane, Vp), axis=-1, keepdims=True)
    hit = (pred == tgt_t).astype(jnp.float32)            # (Bt, 1)

    # Accumulate per-row partials into resident output blocks.
    nll_ref[0] += mask * nll
    hit_ref[0] += mask * hit
    cnt_ref[0] += mask


# ---------------------------------------------------------------------------
# Wrapper
# ---------------------------------------------------------------------------
def _rup(x, m):
    return ((x + m - 1) // m) * m


def _pad_gate_cols(w, H, Hp):
    """(R, 4H) -> (R, 4Hp): pad each gate's column block [i, f, g, o] to Hp lanes."""
    parts = [jnp.pad(w[:, g * H:(g + 1) * H], ((0, 0), (0, Hp - H))) for g in range(4)]
    return jnp.concatenate(parts, axis=1)


def s2s_target_loss(memory_bank, tgt, params):
    """memory_bank: (B, S_mem, H) f32, tgt: (B, T) int32 -> (loss, correct, denom)."""
    B, T = tgt.shape
    E = params["w_ih"].shape[0]
    H = params["w_hh"].shape[0]
    V = params["w_out"].shape[1]

    B_tile = min(128, _rup(B, 8))
    B_pad = _rup(B, B_tile)
    NBT = B_pad // B_tile
    Ep, Hp, Vp = _rup(E, 128), _rup(H, 128), _rup(V, 128)

    # ---- parameter padding / dtype policy (one-time glue) ----
    w_ih_p = jnp.pad(_pad_gate_cols(params["w_ih"], H, Hp),
                     ((0, Ep - E), (0, 0))).astype(jnp.bfloat16)        # (Ep, 4Hp)
    w_hh_p = jnp.pad(_pad_gate_cols(params["w_hh"], H, Hp),
                     ((0, Hp - H), (0, 0))).astype(jnp.bfloat16)        # (Hp, 4Hp)
    b_p = _pad_gate_cols(params["b"], H, Hp).astype(jnp.float32)        # (1, 4Hp)
    w_out_p = jnp.pad(params["w_out"],
                      ((0, Hp - H), (0, Vp - V))).astype(jnp.bfloat16)  # (Hp, Vp)
    # padded vocab columns get -1e30 bias so they never win max / argmax
    b_out_p = jnp.pad(params["b_out"], ((0, 0), (0, Vp - V)),
                      constant_values=-1e30).astype(jnp.float32)        # (1, Vp)

    # ---- activations / targets (glue: gather + pad + transpose) ----
    emb = params["emb_table"][tgt]                                       # (B, T, E)
    emb_p = jnp.pad(emb.astype(jnp.float32),
                    ((0, B_pad - B), (0, 0), (0, Ep - E)))               # (B_pad, T, Ep)
    x_flat = jnp.transpose(emb_p, (1, 0, 2)).reshape(T * B_pad, Ep).astype(jnp.bfloat16)

    tgt_p = jnp.pad(tgt.astype(jnp.int32), ((0, B_pad - B), (0, 0)))     # (B_pad, T)
    tgt_tm = jnp.transpose(tgt_p, (1, 0)).reshape(T, B_pad, 1)           # (T, B_pad, 1)

    h0 = memory_bank[:, -1, :].astype(jnp.float32)                       # (B, H)
    h0_p = jnp.pad(h0, ((0, B_pad - B), (0, Hp - H)))                    # (B_pad, Hp)

    # ---- pass 1: hoisted input projection (one big MXU matmul) ----
    gates_in = _input_projection(x_flat, w_ih_p, b_p).reshape(T, B_pad, 4 * Hp)

    # ---- pass 2: recurrence + output head + fused loss ----
    out_sds = jax.ShapeDtypeStruct((NBT, B_tile, 1), jnp.float32)
    out_spec = pl.BlockSpec((1, B_tile, 1), lambda bt, t: (bt, 0, 0))
    nll_sum, hit_sum, cnt_sum = pl.pallas_call(
        _s2s_recurrence_kernel,
        out_shape=(out_sds, out_sds, out_sds),
        grid_spec=pltpu.PrefetchScalarGridSpec(
            num_scalar_prefetch=0,
            grid=(NBT, T),
            in_specs=[
                pl.BlockSpec((1, B_tile, 4 * Hp), lambda bt, t: (t, bt, 0)),  # gates_in
                pl.BlockSpec((1, B_tile, 1), lambda bt, t: (t, bt, 0)),       # tgt
                pl.BlockSpec((B_tile, Hp), lambda bt, t: (bt, 0)),            # h0
                pl.BlockSpec((Hp, 4 * Hp), lambda bt, t: (0, 0)),             # w_hh
                pl.BlockSpec((Hp, Vp), lambda bt, t: (0, 0)),                 # w_out
                pl.BlockSpec((1, Vp), lambda bt, t: (0, 0)),                  # b_out
            ],
            out_specs=(out_spec, out_spec, out_spec),
            scratch_shapes=[
                pltpu.VMEM((B_tile, Hp), jnp.float32),   # h state
                pltpu.VMEM((B_tile, Hp), jnp.float32),   # c state
            ],
        ),
        compiler_params=pltpu.CompilerParams(
            dimension_semantics=("parallel", "arbitrary"),
            vmem_limit_bytes=32 * 1024 * 1024),
    )(gates_in, tgt_tm, h0_p, w_hh_p, w_out_p, b_out_p)

    num = jnp.sum(nll_sum)
    correct = jnp.sum(hit_sum)
    denom = jnp.sum(cnt_sum) + 1e-6
    loss = num / denom
    return loss, correct, denom


# ---------------------------------------------------------------------------
# Pure-JAX reference mirroring the PyTorch module (same bf16-matmul policy)
# ---------------------------------------------------------------------------
def ref_forward(memory_bank, tgt, params):
    B, T = tgt.shape
    H = params["w_hh"].shape[0]
    V = params["w_out"].shape[1]
    bf = jnp.bfloat16
    w_ih = params["w_ih"].astype(bf)
    w_hh = params["w_hh"].astype(bf)
    w_out = params["w_out"].astype(bf)

    emb = params["emb_table"][tgt]                    # (B, T, E)
    h = memory_bank[:, -1, :].astype(jnp.float32)
    c = memory_bank[:, -1, :].astype(jnp.float32)
    logps = []
    for t in range(T):
        x = emb[:, t, :].astype(bf)
        gates = (jnp.dot(x, w_ih, preferred_element_type=jnp.float32)
                 + jnp.dot(h.astype(bf), w_hh, preferred_element_type=jnp.float32)
                 + params["b"])
        i_g = jax.nn.sigmoid(gates[:, 0:H])
        f_g = jax.nn.sigmoid(gates[:, H:2 * H])
        g_g = jnp.tanh(gates[:, 2 * H:3 * H])
        o_g = jax.nn.sigmoid(gates[:, 3 * H:4 * H])
        c = f_g * c + i_g * g_g
        h = o_g * jnp.tanh(c)
        logits = (jnp.dot(h.astype(bf), w_out, preferred_element_type=jnp.float32)
                  + params["b_out"])
        logps.append(jax.nn.log_softmax(logits, axis=-1))
    logp = jnp.stack(logps, axis=1).reshape(-1, V)    # (B*T, V)
    tgt_flat = tgt.reshape(-1)
    mask = (tgt_flat > 0).astype(jnp.float32)
    nll = -logp[jnp.arange(tgt_flat.shape[0]), tgt_flat]
    num = jnp.sum(mask * nll)
    den = jnp.sum(mask) + 1e-6
    loss = num / den
    correct = jnp.sum(mask * (jnp.argmax(logp, axis=-1) == tgt_flat).astype(jnp.float32))
    return loss, correct, den


def make_params(key, vocab_size, emb_size, hidden_size):
    ks = jax.random.split(key, 6)
    s = 1.0 / np.sqrt(hidden_size)
    return {
        "emb_table": jax.random.normal(ks[0], (vocab_size, emb_size), jnp.float32) * 0.1,
        "w_ih": jax.random.uniform(ks[1], (emb_size, 4 * hidden_size), jnp.float32, -s, s),
        "w_hh": jax.random.uniform(ks[2], (hidden_size, 4 * hidden_size), jnp.float32, -s, s),
        # combined b_ih + b_hh
        "b": jax.random.uniform(ks[3], (1, 4 * hidden_size), jnp.float32, -s, s),
        "w_out": jax.random.uniform(ks[4], (hidden_size, vocab_size), jnp.float32, -s, s),
        "b_out": jax.random.uniform(ks[5], (1, vocab_size), jnp.float32, -s, s),
    }


if __name__ == "__main__":
    B, T, S_MEM = 2, 8, 4
    EMB, HIDDEN, VOCAB = 32, 32, 128

    key = jax.random.PRNGKey(0)
    k_mb, k_tgt, k_par = jax.random.split(key, 3)

    params = make_params(k_par, VOCAB, EMB, HIDDEN)
    memory_bank = jax.random.normal(k_mb, (B, S_MEM, HIDDEN), jnp.float32)
    tgt = jax.random.randint(k_tgt, (B, T), 1, VOCAB, dtype=jnp.int32)
    tgt = tgt.at[:, -2:].set(0)   # some padding positions (masked out, like PAD id 0)

    loss_fn = jax.jit(s2s_target_loss)
    loss, correct, denom = loss_fn(memory_bank, tgt, params)
    jax.block_until_ready((loss, correct, denom))

    r_loss, r_correct, r_denom = ref_forward(memory_bank, tgt, params)
    np.testing.assert_allclose(np.asarray(loss), np.asarray(r_loss), rtol=2e-2, atol=2e-2)
    assert abs(float(correct) - float(r_correct)) < 0.5, (correct, r_correct)
    np.testing.assert_allclose(np.asarray(denom), np.asarray(r_denom), rtol=1e-5)

    print("KERNEL_OK")
</pallas_src>

<mosaic_0001>
module attributes {stable_mosaic.version = 11 : i64} {
  func.func @_inproj_kernel(%arg0: i32, %arg1: memref<64x128xbf16, #tpu.memory_space<vmem>>, %arg2: memref<128x512xbf16, #tpu.memory_space<vmem>>, %arg3: memref<1x512xf32, #tpu.memory_space<vmem>>, %arg4: memref<64x512xf32, #tpu.memory_space<vmem>>) attributes {dimension_semantics = [#tpu.dimension_semantics<parallel>], iteration_bounds = array<i64: 1>, scalar_prefetch = 0 : i64, scratch_operands = 0 : i64, tpu.core_type = #tpu.core_type<tc>, window_params = [{transform_indices = @transform_0, window_bounds = array<i64: 64, 128>}, {pipeline_mode = #tpu.pipeline_mode<synchronous>, transform_indices = @transform_1, window_bounds = array<i64: 128, 512>}, {pipeline_mode = #tpu.pipeline_mode<synchronous>, transform_indices = @transform_2, window_bounds = array<i64: 1, 512>}, {transform_indices = @transform_3, window_bounds = array<i64: 64, 512>}]} {
    %c0 = arith.constant 0 : index
    %c0_0 = arith.constant 0 : index
    %0 = vector.load %arg1[%c0, %c0_0] : memref<64x128xbf16, #tpu.memory_space<vmem>>, vector<64x128xbf16>
    %c0_1 = arith.constant 0 : index
    %c0_2 = arith.constant 0 : index
    %1 = vector.load %arg2[%c0_1, %c0_2] : memref<128x512xbf16, #tpu.memory_space<vmem>>, vector<128x512xbf16>
    %cst = arith.constant dense<0.000000e+00> : vector<64x512xf32>
    %2 = tpu.matmul %0, %1, %cst {dimension_numbers = #tpu.dot_dimension_numbers<[1], [0], [0], [1], [0, 0, 1, 1], [], []>} : vector<64x128xbf16>, vector<128x512xbf16>, vector<64x512xf32> -> vector<64x512xf32>
    %c0_3 = arith.constant 0 : index
    %c0_4 = arith.constant 0 : index
    %3 = vector.load %arg3[%c0_3, %c0_4] : memref<1x512xf32, #tpu.memory_space<vmem>>, vector<1x512xf32>
    %4 = vector.broadcast %3 : vector<1x512xf32> to vector<64x512xf32>
    %5 = arith.addf %2, %4 : vector<64x512xf32>
    %c0_5 = arith.constant 0 : index
    %c0_6 = arith.constant 0 : index
    %6 = vector.load %arg4[%c0_5, %c0_6] : memref<64x512xf32, #tpu.memory_space<vmem>>, vector<64x512xf32>
    tpu.vector_store %arg4[%c0_5, %c0_6], %5 {strides = array<i32>} : memref<64x512xf32, #tpu.memory_space<vmem>>, vector<64x512xf32>,
    return
  }
  func.func @transform_0(%arg0: i32) -> (i32, i32) {
    %c0_i32 = arith.constant 0 : i32
    %c0_i32_0 = arith.constant 0 : i32
    return %arg0, %c0_i32 : i32, i32
  }
  func.func @transform_1(%arg0: i32) -> (i32, i32) {
    %c0_i32 = arith.constant 0 : i32
    %c0_i32_0 = arith.constant 0 : i32
    %c0_i32_1 = arith.constant 0 : i32
    return %c0_i32, %c0_i32_0 : i32, i32
  }
  func.func @transform_2(%arg0: i32) -> (i32, i32) {
    %c0_i32 = arith.constant 0 : i32
    %c0_i32_0 = arith.constant 0 : i32
    %c0_i32_1 = arith.constant 0 : i32
    return %c0_i32, %c0_i32_0 : i32, i32
  }
  func.func @transform_3(%arg0: i32) -> (i32, i32) {
    %c0_i32 = arith.constant 0 : i32
    %c0_i32_0 = arith.constant 0 : i32
    return %arg0, %c0_i32 : i32, i32
  }
}

module attributes {stable_mosaic.version = 11 : i64} {
  func.func @_s2s_recurrence_kernel(%arg0: i32, %arg1: i32, %arg2: memref<1x8x512xf32, #tpu.memory_space<vmem>>, %arg3: memref<1x8x1xi32, #tpu.memory_space<vmem>>, %arg4: memref<8x128xf32, #tpu.memory_space<vmem>>, %arg5: memref<128x512xbf16, #tpu.memory_space<vmem>>, %arg6: memref<128x128xbf16, #tpu.memory_space<vmem>>, %arg7: memref<1x128xf32, #tpu.memory_space<vmem>>, %arg8: memref<1x8x1xf32, #tpu.memory_space<vmem>>, %arg9: memref<1x8x1xf32, #tpu.memory_space<vmem>>, %arg10: memref<1x8x1xf32, #tpu.memory_space<vmem>>, %arg11: memref<8x128xf32, #tpu.memory_space<vmem>>, %arg12: memref<8x128xf32, #tpu.memory_space<vmem>>) attributes {dimension_semantics = [#tpu.dimension_semantics<parallel>, #tpu.dimension_semantics<arbitrary>], iteration_bounds = array<i64: 1, 8>, scalar_prefetch = 0 : i64, scratch_operands = 2 : i64, tpu.core_type = #tpu.core_type<tc>, window_params = [{transform_indices = @transform_0, window_bounds = array<i64: 1, 8, 512>}, {transform_indices = @transform_1, window_bounds = array<i64: 1, 8, 1>}, {transform_indices = @transform_2, window_bounds = array<i64: 8, 128>}, {pipeline_mode = #tpu.pipeline_mode<synchronous>, transform_indices = @transform_3, window_bounds = array<i64: 128, 512>}, {pipeline_mode = #tpu.pipeline_mode<synchronous>, transform_indices = @transform_4, window_bounds = array<i64: 128, 128>}, {pipeline_mode = #tpu.pipeline_mode<synchronous>, transform_indices = @transform_5, window_bounds = array<i64: 1, 128>}, {transform_indices = @transform_6, window_bounds = array<i64: 1, 8, 1>}, {transform_indices = @transform_7, window_bounds = array<i64: 1, 8, 1>}, {transform_indices = @transform_8, window_bounds = array<i64: 1, 8, 1>}]} {
    %c0_i32 = arith.constant 0 : i32
    %0 = arith.cmpi eq, %arg1, %c0_i32 : i32
    %1 = arith.extui %0 : i1 to i32
    %c0_i32_0 = arith.constant 0 : i32
    %2 = arith.cmpi ne, %1, %c0_i32_0 : i32
    scf.if %2 {
      %c0_48 = arith.constant 0 : index
      %c0_49 = arith.constant 0 : index
      %96 = vector.load %arg4[%c0_48, %c0_49] : memref<8x128xf32, #tpu.memory_space<vmem>>, vector<8x128xf32>
      %c0_50 = arith.constant 0 : index
      %c0_51 = arith.constant 0 : index
      %97 = vector.load %arg11[%c0_50, %c0_51] : memref<8x128xf32, #tpu.memory_space<vmem>>, vector<8x128xf32>
      tpu.vector_store %arg11[%c0_50, %c0_51], %96 {strides = array<i32>} : memref<8x128xf32, #tpu.memory_space<vmem>>, vector<8x128xf32>,
      %c0_52 = arith.constant 0 : index
      %c0_53 = arith.constant 0 : index
      %98 = vector.load %arg4[%c0_52, %c0_53] : memref<8x128xf32, #tpu.memory_space<vmem>>, vector<8x128xf32>
      %c0_54 = arith.constant 0 : index
      %c0_55 = arith.constant 0 : index
      %99 = vector.load %arg12[%c0_54, %c0_55] : memref<8x128xf32, #tpu.memory_space<vmem>>, vector<8x128xf32>
      tpu.vector_store %arg12[%c0_54, %c0_55], %98 {strides = array<i32>} : memref<8x128xf32, #tpu.memory_space<vmem>>, vector<8x128xf32>,
      %cst_56 = arith.constant 0.000000e+00 : f32
      %100 = vector.broadcast %cst_56 : f32 to vector<1x8x1xf32>
      %c0_57 = arith.constant 0 : index
      %c0_58 = arith.constant 0 : index
      %c0_59 = arith.constant 0 : index
      %101 = vector.load %arg8[%c0_57, %c0_58, %c0_59] : memref<1x8x1xf32, #tpu.memory_space<vmem>>, vector<1x8x1xf32>
      tpu.vector_store %arg8[%c0_57, %c0_58, %c0_59], %100 {strides = array<i32>} : memref<1x8x1xf32, #tpu.memory_space<vmem>>, vector<1x8x1xf32>,
      %cst_60 = arith.constant 0.000000e+00 : f32
      %102 = vector.broadcast %cst_60 : f32 to vector<1x8x1xf32>
      %c0_61 = arith.constant 0 : index
      %c0_62 = arith.constant 0 : index
      %c0_63 = arith.constant 0 : index
      %103 = vector.load %arg9[%c0_61, %c0_62, %c0_63] : memref<1x8x1xf32, #tpu.memory_space<vmem>>, vector<1x8x1xf32>
      tpu.vector_store %arg9[%c0_61, %c0_62, %c0_63], %102 {strides = array<i32>} : memref<1x8x1xf32, #tpu.memory_space<vmem>>, vector<1x8x1xf32>,
      %cst_64 = arith.constant 0.000000e+00 : f32
      %104 = vector.broadcast %cst_64 : f32 to vector<1x8x1xf32>
      %c0_65 = arith.constant 0 : index
      %c0_66 = arith.constant 0 : index
      %c0_67 = arith.constant 0 : index
      %105 = vector.load %arg10[%c0_65, %c0_66, %c0_67] : memref<1x8x1xf32, #tpu.memory_space<vmem>>, vector<1x8x1xf32>
      tpu.vector_store %arg10[%c0_65, %c0_66, %c0_67], %104 {strides = array<i32>} : memref<1x8x1xf32, #tpu.memory_space<vmem>>, vector<1x8x1xf32>,
    } else {
    }
    %c0 = arith.constant 0 : index
    %c0_1 = arith.constant 0 : index
    %3 = vector.load %arg11[%c0, %c0_1] : memref<8x128xf32, #tpu.memory_space<vmem>>, vector<8x128xf32>
    %c0_2 = arith.constant 0 : index
    %c0_3 = arith.constant 0 : index
    %4 = vector.load %arg12[%c0_2, %c0_3] : memref<8x128xf32, #tpu.memory_space<vmem>>, vector<8x128xf32>
    %c0_4 = arith.constant 0 : index
    %c0_5 = arith.constant 0 : index
    %c0_6 = arith.constant 0 : index
    %5 = vector.load %arg2[%c0_4, %c0_5, %c0_6] : memref<1x8x512xf32, #tpu.memory_space<vmem>>, vector<1x8x512xf32>
    %6 = vector.shape_cast %5 : vector<1x8x512xf32> to vector<8x512xf32>
    %7 = arith.truncf %3 : vector<8x128xf32> to vector<8x128xbf16>
    %c0_7 = arith.constant 0 : index
    %c0_8 = arith.constant 0 : index
    %8 = vector.load %arg5[%c0_7, %c0_8] : memref<128x512xbf16, #tpu.memory_space<vmem>>, vector<128x512xbf16>
    %cst = arith.constant dense<0.000000e+00> : vector<8x512xf32>
    %9 = tpu.matmul %7, %8, %cst {dimension_numbers = #tpu.dot_dimension_numbers<[1], [0], [0], [1], [0, 0, 1, 1], [], []>} : vector<8x128xbf16>, vector<128x512xbf16>, vector<8x512xf32> -> vector<8x512xf32>
    %10 = arith.addf %6, %9 : vector<8x512xf32>
    %11 = vector.extract_strided_slice %10 {offsets = [0, 0], sizes = [8, 128], strides = [1, 1]} : vector<8x512xf32> to vector<8x128xf32>
    %12 = arith.negf %11 : vector<8x128xf32>
    %13 = math.exp %12 : vector<8x128xf32>
    %cst_9 = arith.constant 1.000000e+00 : f32
    %14 = vector.broadcast %cst_9 : f32 to vector<8x128xf32>
    %15 = arith.addf %14, %13 : vector<8x128xf32>
    %16 = arith.divf %14, %15 : vector<8x128xf32>
    %17 = vector.extract_strided_slice %10 {offsets = [0, 128], sizes = [8, 128], strides = [1, 1]} : vector<8x512xf32> to vector<8x128xf32>
    %18 = arith.negf %17 : vector<8x128xf32>
    %19 = math.exp %18 : vector<8x128xf32>
    %cst_10 = arith.constant 1.000000e+00 : f32
    %20 = vector.broadcast %cst_10 : f32 to vector<8x128xf32>
    %21 = arith.addf %20, %19 : vector<8x128xf32>
    %22 = arith.divf %20, %21 : vector<8x128xf32>
    %23 = vector.extract_strided_slice %10 {offsets = [0, 256], sizes = [8, 128], strides = [1, 1]} : vector<8x512xf32> to vector<8x128xf32>
    %24 = math.tanh %23 : vector<8x128xf32>
    %25 = vector.extract_strided_slice %10 {offsets = [0, 384], sizes = [8, 128], strides = [1, 1]} : vector<8x512xf32> to vector<8x128xf32>
    %26 = arith.negf %25 : vector<8x128xf32>
    %27 = math.exp %26 : vector<8x128xf32>
    %cst_11 = arith.constant 1.000000e+00 : f32
    %28 = vector.broadcast %cst_11 : f32 to vector<8x128xf32>
    %29 = arith.addf %28, %27 : vector<8x128xf32>
    %30 = arith.divf %28, %29 : vector<8x128xf32>
    %31 = arith.mulf %22, %4 : vector<8x128xf32>
    %32 = arith.mulf %16, %24 : vector<8x128xf32>
    %33 = arith.addf %31, %32 : vector<8x128xf32>
    %34 = math.tanh %33 : vector<8x128xf32>
    %35 = arith.mulf %30, %34 : vector<8x128xf32>
    %c0_12 = arith.constant 0 : index
    %c0_13 = arith.constant 0 : index
    %36 = vector.load %arg11[%c0_12, %c0_13] : memref<8x128xf32, #tpu.memory_space<vmem>>, vector<8x128xf32>
    tpu.vector_store %arg11[%c0_12, %c0_13], %35 {strides = array<i32>} : memref<8x128xf32, #tpu.memory_space<vmem>>, vector<8x128xf32>,
    %c0_14 = arith.constant 0 : index
    %c0_15 = arith.constant 0 : index
    %37 = vector.load %arg12[%c0_14, %c0_15] : memref<8x128xf32, #tpu.memory_space<vmem>>, vector<8x128xf32>
    tpu.vector_store %arg12[%c0_14, %c0_15], %33 {strides = array<i32>} : memref<8x128xf32, #tpu.memory_space<vmem>>, vector<8x128xf32>,
    %38 = arith.truncf %35 : vector<8x128xf32> to vector<8x128xbf16>
    %c0_16 = arith.constant 0 : index
    %c0_17 = arith.constant 0 : index
    %39 = vector.load %arg6[%c0_16, %c0_17] : memref<128x128xbf16, #tpu.memory_space<vmem>>, vector<128x128xbf16>
    %cst_18 = arith.constant dense<0.000000e+00> : vector<8x128xf32>
    %40 = tpu.matmul %38, %39, %cst_18 {dimension_numbers = #tpu.dot_dimension_numbers<[1], [0], [0], [1], [0, 0, 1, 1], [], []>} : vector<8x128xbf16>, vector<128x128xbf16>, vector<8x128xf32> -> vector<8x128xf32>
    %c0_19 = arith.constant 0 : index
    %c0_20 = arith.constant 0 : index
    %41 = vector.load %arg7[%c0_19, %c0_20] : memref<1x128xf32, #tpu.memory_space<vmem>>, vector<1x128xf32>
    %42 = vector.broadcast %41 : vector<1x128xf32> to vector<8x128xf32>
    %43 = arith.addf %40, %42 : vector<8x128xf32>
    %c0_21 = arith.constant 0 : index
    %c0_22 = arith.constant 0 : index
    %c0_23 = arith.constant 0 : index
    %44 = vector.load %arg3[%c0_21, %c0_22, %c0_23] : memref<1x8x1xi32, #tpu.memory_space<vmem>>, vector<1x8x1xi32>
    %45 = vector.shape_cast %44 : vector<1x8x1xi32> to vector<8x1xi32>
    %c0_i32_24 = arith.constant 0 : i32
    %46 = vector.broadcast %c0_i32_24 : i32 to vector<8x1xi32>
    %47 = arith.cmpi sgt, %45, %46 : vector<8x1xi32>
    %48 = arith.extui %47 : vector<8x1xi1> to vector<8x1xi32>
    %49 = arith.sitofp %48 : vector<8x1xi32> to vector<8x1xf32>
    %50 = tpu.iota {dimensions = array<i32: 1>} : vector<8x128xi32>
    %51 = vector.broadcast %45 : vector<8x1xi32> to vector<8x128xi32>
    %52 = arith.cmpi eq, %50, %51 : vector<8x128xi32>
    %cst_25 = arith.constant dense<0xFF800000> : vector<8xf32>
    %53 = vector.multi_reduction <maximumf>, %43, %cst_25 [1] : vector<8x128xf32> to vector<8xf32>
    %54 = vector.shape_cast %53 : vector<8xf32> to vector<8x1xf32>
    %55 = vector.broadcast %54 : vector<8x1xf32> to vector<8x128xf32>
    %56 = arith.subf %43, %55 : vector<8x128xf32>
    %57 = math.exp %56 : vector<8x128xf32>
    %cst_26 = arith.constant dense<0.000000e+00> : vector<8xf32>
    %58 = vector.multi_reduction <add>, %57, %cst_26 [1] : vector<8x128xf32> to vector<8xf32>
    %59 = vector.shape_cast %58 : vector<8xf32> to vector<8x1xf32>
    %60 = math.log %59 : vector<8x1xf32>
    %61 = arith.addf %54, %60 : vector<8x1xf32>
    %cst_27 = arith.constant 0.000000e+00 : f32
    %62 = vector.broadcast %cst_27 : f32 to vector<8x128xf32>
    %63 = arith.select %52, %43, %62 : vector<8x128xi1>, vector<8x128xf32>
    %cst_28 = arith.constant dense<0.000000e+00> : vector<8xf32>
    %64 = vector.multi_reduction <add>, %63, %cst_28 [1] : vector<8x128xf32> to vector<8xf32>
    %65 = vector.shape_cast %64 : vector<8xf32> to vector<8x1xf32>
    %66 = arith.subf %61, %65 : vector<8x1xf32>
    %67 = vector.broadcast %54 : vector<8x1xf32> to vector<8x128xf32>
    %68 = arith.cmpf oeq, %43, %67 : vector<8x128xf32>
    %c128_i32 = arith.constant 128 : i32
    %69 = vector.broadcast %c128_i32 : i32 to vector<8x128xi32>
    %70 = arith.select %68, %50, %69 : vector<8x128xi1>, vector<8x128xi32>
    %cst_29 = arith.constant dense<2147483647> : vector<8xi32>
    %71 = vector.multi_reduction <minsi>, %70, %cst_29 [1] : vector<8x128xi32> to vector<8xi32>
    %72 = vector.shape_cast %71 : vector<8xi32> to vector<8x1xi32>
    %73 = arith.cmpi eq, %72, %45 : vector<8x1xi32>
    %74 = arith.extui %73 : vector<8x1xi1> to vector<8x1xi32>
    %75 = arith.sitofp %74 : vector<8x1xi32> to vector<8x1xf32>
    %c0_30 = arith.constant 0 : index
    %c0_31 = arith.constant 0 : index
    %c0_32 = arith.constant 0 : index
    %76 = vector.load %arg8[%c0_30, %c0_31, %c0_32] : memref<1x8x1xf32, #tpu.memory_space<vmem>>, vector<1x8x1xf32>
    %77 = vector.shape_cast %76 : vector<1x8x1xf32> to vector<8x1xf32>
    %78 = arith.mulf %49, %66 : vector<8x1xf32>
    %79 = arith.addf %77, %78 : vector<8x1xf32>
    %c0_33 = arith.constant 0 : index
    %c0_34 = arith.constant 0 : index
    %c0_35 = arith.constant 0 : index
    %80 = vector.load %arg8[%c0_33, %c0_34, %c0_35] : memref<1x8x1xf32, #tpu.memory_space<vmem>>, vector<1x8x1xf32>
    %81 = vector.shape_cast %80 : vector<1x8x1xf32> to vector<8x1xf32>
    %82 = vector.shape_cast %79 : vector<8x1xf32> to vector<1x8x1xf32>
    tpu.vector_store %arg8[%c0_33, %c0_34, %c0_35], %82 {strides = array<i32>} : memref<1x8x1xf32, #tpu.memory_space<vmem>>, vector<1x8x1xf32>,
    %c0_36 = arith.constant 0 : index
    %c0_37 = arith.constant 0 : index
    %c0_38 = arith.constant 0 : index
    %83 = vector.load %arg9[%c0_36, %c0_37, %c0_38] : memref<1x8x1xf32, #tpu.memory_space<vmem>>, vector<1x8x1xf32>
    %84 = vector.shape_cast %83 : vector<1x8x1xf32> to vector<8x1xf32>
    %85 = arith.mulf %49, %75 : vector<8x1xf32>
    %86 = arith.addf %84, %85 : vector<8x1xf32>
    %c0_39 = arith.constant 0 : index
    %c0_40 = arith.constant 0 : index
    %c0_41 = arith.constant 0 : index
    %87 = vector.load %arg9[%c0_39, %c0_40, %c0_41] : memref<1x8x1xf32, #tpu.memory_space<vmem>>, vector<1x8x1xf32>
    %88 = vector.shape_cast %87 : vector<1x8x1xf32> to vector<8x1xf32>
    %89 = vector.shape_cast %86 : vector<8x1xf32> to vector<1x8x1xf32>
    tpu.vector_store %arg9[%c0_39, %c0_40, %c0_41], %89 {strides = array<i32>} : memref<1x8x1xf32, #tpu.memory_space<vmem>>, vector<1x8x1xf32>,
    %c0_42 = arith.constant 0 : index
    %c0_43 = arith.constant 0 : index
    %c0_44 = arith.constant 0 : index
    %90 = vector.load %arg10[%c0_42, %c0_43, %c0_44] : memref<1x8x1xf32, #tpu.memory_space<vmem>>, vector<1x8x1xf32>
    %91 = vector.shape_cast %90 : vector<1x8x1xf32> to vector<8x1xf32>
    %92 = arith.addf %91, %49 : vector<8x1xf32>
    %c0_45 = arith.constant 0 : index
    %c0_46 = arith.constant 0 : index
    %c0_47 = arith.constant 0 : index
    %93 = vector.load %arg10[%c0_45, %c0_46, %c0_47] : memref<1x8x1xf32, #tpu.memory_space<vmem>>, vector<1x8x1xf32>
    %94 = vector.shape_cast %93 : vector<1x8x1xf32> to vector<8x1xf32>
    %95 = vector.shape_cast %92 : vector<8x1xf32> to vector<1x8x1xf32>
    tpu.vector_store %arg10[%c0_45, %c0_46, %c0_47], %95 {strides = array<i32>} : memref<1x8x1xf32, #tpu.memory_space<vmem>>, vector<1x8x1xf32>,
    return
  }
  func.func @transform_0(%arg0: i32, %arg1: i32) -> (i32, i32, i32) {
    %c0_i32 = arith.constant 0 : i32
    %c0_i32_0 = arith.constant 0 : i32
    return %arg1, %arg0, %c0_i32 : i32, i32, i32
  }
  func.func @transform_1(%arg0: i32, %arg1: i32) -> (i32, i32, i32) {
    %c0_i32 = arith.constant 0 : i32
    %c0_i32_0 = arith.constant 0 : i32
    return %arg1, %arg0, %c0_i32 : i32, i32, i32
  }
  func.func @transform_2(%arg0: i32, %arg1: i32) -> (i32, i32) {
    %c0_i32 = arith.constant 0 : i32
    %c0_i32_0 = arith.constant 0 : i32
    return %arg0, %c0_i32 : i32, i32
  }
  func.func @transform_3(%arg0: i32, %arg1: i32) -> (i32, i32) {
    %c0_i32 = arith.constant 0 : i32
    %c0_i32_0 = arith.constant 0 : i32
    %c0_i32_1 = arith.constant 0 : i32
    return %c0_i32, %c0_i32_0 : i32, i32
  }
  func.func @transform_4(%arg0: i32, %arg1: i32) -> (i32, i32) {
    %c0_i32 = arith.constant 0 : i32
    %c0_i32_0 = arith.constant 0 : i32
    %c0_i32_1 = arith.constant 0 : i32
    return %c0_i32, %c0_i32_0 : i32, i32
  }
  func.func @transform_5(%arg0: i32, %arg1: i32) -> (i32, i32) {
    %c0_i32 = arith.constant 0 : i32
    %c0_i32_0 = arith.constant 0 : i32
    %c0_i32_1 = arith.constant 0 : i32
    return %c0_i32, %c0_i32_0 : i32, i32
  }
  func.func @transform_6(%arg0: i32, %arg1: i32) -> (i32, i32, i32) {
    %c0_i32 = arith.constant 0 : i32
    %c0_i32_0 = arith.constant 0 : i32
    %c0_i32_1 = arith.constant 0 : i32
    return %arg0, %c0_i32, %c0_i32_0 : i32, i32, i32
  }
  func.func @transform_7(%arg0: i32, %arg1: i32) -> (i32, i32, i32) {
    %c0_i32 = arith.constant 0 : i32
    %c0_i32_0 = arith.constant 0 : i32
    %c0_i32_1 = arith.constant 0 : i32
    return %arg0, %c0_i32, %c0_i32_0 : i32, i32, i32
  }
  func.func @transform_8(%arg0: i32, %arg1: i32) -> (i32, i32, i32) {
    %c0_i32 = arith.constant 0 : i32
    %c0_i32_0 = arith.constant 0 : i32
    %c0_i32_1 = arith.constant 0 : i32
    return %arg0, %c0_i32, %c0_i32_0 : i32, i32, i32
  }
}

</mosaic_0001>

<llo_original>
// kernel: s2s_target_loss.2
$region0: #{s2s_target_loss.2}
  #allocation0 [shape = 'u32[]', space=smem, size = 0x4, offset = 0x4, fixed_abs, tag = 'smem constant byte address 0x4 - core index']
  #allocation1 [shape = 'u32[144,128]{1,0:T(1,128)}', space=vmem, size = 0x12000, scoped, tag = 'internal scratch']
  %s0 = inlined_call_operand.vmem [shape: bf16[64,128], index: 0, kind: input, shape index: {}]
  %s1 = inlined_call_operand.vmem [shape: bf16[128,512], index: 1, kind: input, shape index: {}]
  %s2 = inlined_call_operand.vmem [shape: f32[1,512], index: 2, kind: input, shape index: {}]
  %s3 = inlined_call_operand.vmem [shape: f32[64,512], index: 3, kind: output, shape index: {}]
  %s4 = sld [smem:[#allocation0]]
  $region22: #{s2s_target_loss.2} parent=0
    _
  %s6 = ssub.s32 1, %s4
  %s7 = scalar_select 0, %s6, %s4
  // Predicated region
  $region2: #{s2s_target_loss.2} parent=0 // pred_check
    _
  $region3: #{s2s_target_loss.2} parent=0 // pred_check_branch
    %9 = sbr.rel (0) target = $region5
  $region4: #{s2s_target_loss.2} parent=0 // pred_region
    _
  $region5: #{s2s_target_loss.2} parent=0 // pred_fallthru
    _
  // Predicated region
  $region6: #{s2s_target_loss.2} parent=0 // pred_check
    _
  $region7: #{s2s_target_loss.2} parent=0 // pred_check_branch
    %11 = sbr.rel (0) target = $region9
  $region8: #{s2s_target_loss.2} parent=0 // pred_region
    _
  $region9: #{s2s_target_loss.2} parent=0 // pred_fallthru
    _
  // Predicated region
  $region10: #{s2s_target_loss.2} parent=0 // pred_check
    _
  $region11: #{s2s_target_loss.2} parent=0 // pred_check_branch
    %13 = sbr.rel (0) target = $region13
  $region12: #{s2s_target_loss.2} parent=0 // pred_region
    _
  $region13: #{s2s_target_loss.2} parent=0 // pred_fallthru
    _
  %v15 = vld [vmem:[%s0] sm:$0xf]
  %v16 = vld [vmem:[%s0 + $0x4] sm:$0xf]
  %v17 = vld [vmem:[%s0 + $0x8] sm:$0xf]
  %v18 = vld [vmem:[%s0 + $0xc] sm:$0xf]
  %v19 = vld [vmem:[%s0 + $0x10] sm:$0xf]
  %v20 = vld [vmem:[%s0 + $0x14] sm:$0xf]
  %v21 = vld [vmem:[%s0 + $0x18] sm:$0xf]
  %v22 = vld [vmem:[%s0 + $0x1c] sm:$0xf]
  %v23 = vld [vmem:[%s1] sm:$0xff]
  %v24 = vld [vmem:[%s1 + $0x8] sm:$0xff]
  %v25 = vld [vmem:[%s1 + $0x10] sm:$0xff]
  %v26 = vld [vmem:[%s1 + $0x18] sm:$0xff]
  %v27 = vld [vmem:[%s1 + $0x20] sm:$0xff]
  %v28 = vld [vmem:[%s1 + $0x28] sm:$0xff]
  %v29 = vld [vmem:[%s1 + $0x30] sm:$0xff]
  %v30 = vld [vmem:[%s1 + $0x38] sm:$0xff]
  %v31 = vld [vmem:[%s1 + $0x40] sm:$0xff]
  %v32 = vld [vmem:[%s1 + $0x48] sm:$0xff]
  %v33 = vld [vmem:[%s1 + $0x50] sm:$0xff]
  %v34 = vld [vmem:[%s1 + $0x58] sm:$0xff]
  %v35 = vld [vmem:[%s1 + $0x60] sm:$0xff]
  %v36 = vld [vmem:[%s1 + $0x68] sm:$0xff]
  %v37 = vld [vmem:[%s1 + $0x70] sm:$0xff]
  %v38 = vld [vmem:[%s1 + $0x78] sm:$0xff]
  %v39 = vld [vmem:[%s1 + $0x80] sm:$0xff]
  %v40 = vld [vmem:[%s1 + $0x88] sm:$0xff]
  %v41 = vld [vmem:[%s1 + $0x90] sm:$0xff]
  %v42 = vld [vmem:[%s1 + $0x98] sm:$0xff]
  %v43 = vld [vmem:[%s1 + $0xa0] sm:$0xff]
  %v44 = vld [vmem:[%s1 + $0xa8] sm:$0xff]
  %v45 = vld [vmem:[%s1 + $0xb0] sm:$0xff]
  %v46 = vld [vmem:[%s1 + $0xb8] sm:$0xff]
  %v47 = vld [vmem:[%s1 + $0xc0] sm:$0xff]
  %v48 = vld [vmem:[%s1 + $0xc8] sm:$0xff]
  %v49 = vld [vmem:[%s1 + $0xd0] sm:$0xff]
  %v50 = vld [vmem:[%s1 + $0xd8] sm:$0xff]
  %v51 = vld [vmem:[%s1 + $0xe0] sm:$0xff]
  %v52 = vld [vmem:[%s1 + $0xe8] sm:$0xff]
  %v53 = vld [vmem:[%s1 + $0xf0] sm:$0xff]
  %v54 = vld [vmem:[%s1 + $0xf8] sm:$0xff]
  %v55 = vld [vmem:[%s2] sm:$0xf]
  %v57 = vlaneseq
  %v58 = vshrl.u32 %v57, 7
  %v59 = vsub.s32 0, %v58
  %v60 = vrot.slane %v55, %v59
  %v61 = vlaneseq
  %v62 = vshrl.u32 %v61, 7
  %v63 = vsub.s32 1, %v62
  %v64 = vrot.slane %v55, %v63
  %v65 = vlaneseq
  %v66 = vshrl.u32 %v65, 7
  %v67 = vsub.s32 2, %v66
  %v68 = vrot.slane %v55, %v67
  %v69 = vlaneseq
  %v70 = vshrl.u32 %v69, 7
  %v71 = vsub.s32 3, %v70
  %v72 = vrot.slane %v55, %v71
  %v85 = vunpack.c.l.b16 %v15
  %v86 = vunpack.c.l.b16 %v16
  %v87 = vunpack.c.l.b16 %v17
  %v88 = vunpack.c.l.b16 %v18
  %v89 = vunpack.c.l.b16 %v19
  %v90 = vunpack.c.l.b16 %v20
  %v91 = vunpack.c.l.b16 %v21
  %v92 = vunpack.c.l.b16 %v22
  %v93 = vpack.c.b16 %v86, %v85
  %v94 = vpack.c.b16 %v88, %v87
  %v95 = vpack.c.b16 %v90, %v89
  %v96 = vpack.c.b16 %v92, %v91
  %v133 = vunpack.c.l.b16 %v23
  %v134 = vunpack.c.h.b16 %v23
  %v135 = vunpack.c.l.b16 %v24
  %v136 = vunpack.c.h.b16 %v24
  %v137 = vunpack.c.l.b16 %v25
  %v138 = vunpack.c.h.b16 %v25
  %v139 = vunpack.c.l.b16 %v26
  %v140 = vunpack.c.h.b16 %v26
  %v141 = vunpack.c.l.b16 %v27
  %v142 = vunpack.c.h.b16 %v27
  %v143 = vunpack.c.l.b16 %v28
  %v144 = vunpack.c.h.b16 %v28
  %v145 = vunpack.c.l.b16 %v29
  %v146 = vunpack.c.h.b16 %v29
  %v147 = vunpack.c.l.b16 %v30
  %v148 = vunpack.c.h.b16 %v30
  %v149 = vunpack.c.l.b16 %v31
  %v150 = vunpack.c.h.b16 %v31
  %v151 = vunpack.c.l.b16 %v32
  %v152 = vunpack.c.h.b16 %v32
  %v153 = vunpack.c.l.b16 %v33
  %v154 = vunpack.c.h.b16 %v33
  %v155 = vunpack.c.l.b16 %v34
  %v156 = vunpack.c.h.b16 %v34
  %v157 = vunpack.c.l.b16 %v35
  %v158 = vunpack.c.h.b16 %v35
  %v159 = vunpack.c.l.b16 %v36
  %v160 = vunpack.c.h.b16 %v36
  %v161 = vunpack.c.l.b16 %v37
  %v162 = vunpack.c.h.b16 %v37
  %v163 = vunpack.c.l.b16 %v38
  %v164 = vunpack.c.h.b16 %v38
  %v165 = vunpack.c.l.b16 %v39
  %v166 = vunpack.c.h.b16 %v39
  %v167 = vunpack.c.l.b16 %v40
  %v168 = vunpack.c.h.b16 %v40
  %v169 = vunpack.c.l.b16 %v41
  %v170 = vunpack.c.h.b16 %v41
  %v171 = vunpack.c.l.b16 %v42
  %v172 = vunpack.c.h.b16 %v42
  %v173 = vunpack.c.l.b16 %v43
  %v174 = vunpack.c.h.b16 %v43
  %v175 = vunpack.c.l.b16 %v44
  %v176 = vunpack.c.h.b16 %v44
  %v177 = vunpack.c.l.b16 %v45
  %v178 = vunpack.c.h.b16 %v45
  %v179 = vunpack.c.l.b16 %v46
  %v180 = vunpack.c.h.b16 %v46
  %v181 = vunpack.c.l.b16 %v47
  %v182 = vunpack.c.h.b16 %v47
  %v183 = vunpack.c.l.b16 %v48
  %v184 = vunpack.c.h.b16 %v48
  %v185 = vunpack.c.l.b16 %v49
  %v186 = vunpack.c.h.b16 %v49
  %v187 = vunpack.c.l.b16 %v50
  %v188 = vunpack.c.h.b16 %v50
  %v189 = vunpack.c.l.b16 %v51
  %v190 = vunpack.c.h.b16 %v51
  %v191 = vunpack.c.l.b16 %v52
  %v192 = vunpack.c.h.b16 %v52
  %v193 = vunpack.c.l.b16 %v53
  %v194 = vunpack.c.h.b16 %v53
  %v195 = vunpack.c.l.b16 %v54
  %v196 = vunpack.c.h.b16 %v54
  %v197 = vpack.c.b16 %v137, %v133
  %v198 = vpack.c.b16 %v138, %v134
  %v199 = vpack.c.b16 %v139, %v135
  %v200 = vpack.c.b16 %v140, %v136
  %v201 = vpack.c.b16 %v145, %v141
  %v202 = vpack.c.b16 %v146, %v142
  %v203 = vpack.c.b16 %v147, %v143
  %v204 = vpack.c.b16 %v148, %v144
  %v205 = vpack.c.b16 %v153, %v149
  %v206 = vpack.c.b16 %v154, %v150
  %v207 = vpack.c.b16 %v155, %v151
  %v208 = vpack.c.b16 %v156, %v152
  %v209 = vpack.c.b16 %v161, %v157
  %v210 = vpack.c.b16 %v162, %v158
  %v211 = vpack.c.b16 %v163, %v159
  %v212 = vpack.c.b16 %v164, %v160
  %v213 = vpack.c.b16 %v169, %v165
  %v214 = vpack.c.b16 %v170, %v166
  %v215 = vpack.c.b16 %v171, %v167
  %v216 = vpack.c.b16 %v172, %v168
  %v217 = vpack.c.b16 %v177, %v173
  %v218 = vpack.c.b16 %v178, %v174
  %v219 = vpack.c.b16 %v179, %v175
  %v220 = vpack.c.b16 %v180, %v176
  %v221 = vpack.c.b16 %v185, %v181
  %v222 = vpack.c.b16 %v186, %v182
  %v223 = vpack.c.b16 %v187, %v183
  %v224 = vpack.c.b16 %v188, %v184
  %v225 = vpack.c.b16 %v193, %v189
  %v226 = vpack.c.b16 %v194, %v190
  %v227 = vpack.c.b16 %v195, %v191
  %v228 = vpack.c.b16 %v196, %v192
  %261 = vmatprep.subr.bf16.mxu0 %v226
  %262 = vmatpush1.bf16.msra.mxu0 %v225
  %263 = vmatprep.subr.bf16.mxu0 %v222
  %264 = vmatpush1.bf16.msra.mxu0 %v221
  %265 = vmatprep.subr.bf16.mxu0 %v218
  %266 = vmatpush1.bf16.msra.mxu0 %v217
  %267 = vmatprep.subr.bf16.mxu0 %v214
  %268 = vmatpush1.bf16.msra.mxu0 %v213
  %269 = vmatprep.subr.bf16.mxu0 %v210
  %270 = vmatpush1.bf16.msra.mxu0 %v209
  %271 = vmatprep.subr.bf16.mxu0 %v206
  %272 = vmatpush1.bf16.msra.mxu0 %v205
  %273 = vmatprep.subr.bf16.mxu0 %v202
  %274 = vmatpush1.bf16.msra.mxu0 %v201
  %275 = vmatprep.subr.bf16.mxu0 %v198
  %276 = vmatpush1.bf16.msra.mxu0 %v197
  %277 = vmatprep.subr.bf16.mxu0 0
  %278 = vmatpush2.bf16.msra.mxu0 0
  %279 = vmatprep.subr.bf16.mxu0 0
  %280 = vmatpush2.bf16.msra.mxu0 0
  %281 = vmatprep.subr.bf16.mxu0 0
  %282 = vmatpush2.bf16.msra.mxu0 0
  %283 = vmatprep.subr.bf16.mxu0 0
  %284 = vmatpush2.bf16.msra.mxu0 0
  %285 = vmatprep.subr.bf16.mxu0 0
  %286 = vmatpush2.bf16.msra.mxu0 0
  %287 = vmatprep.subr.bf16.mxu0 0
  %288 = vmatpush2.bf16.msra.mxu0 0
  %289 = vmatprep.subr.bf16.mxu0 0
  %290 = vmatpush2.bf16.msra.mxu0 0
  %291 = vmatprep.subr.bf16.mxu0 0
  %292 = vmatpush2.bf16.msra.mxu0 0
  %293 = vmatprep.mubr.bf16.mxu0 0
  %294 = vmatmul.mubr.bf16.gmra.mxu0 %v93
  %v295 = vpop.f32.mrf.mxu0
  %v296 = vadd.f32 %v60, %v295
  %v297 = vpop.f32.mrf.mxu0
  %v298 = vadd.f32 %v64, %v297
  %v299 = vpop.f32.mrf.mxu0
  %v300 = vadd.f32 %v60, %v299
  %v301 = vpop.f32.mrf.mxu0
  %v302 = vadd.f32 %v64, %v301
  %303 = vmatprep.mubr.bf16.mxu0 0
  %304 = vmatmul.mubr.bf16.gmra.mxu0 %v94
  %v305 = vpop.f32.mrf.mxu0
  %v306 = vadd.f32 %v60, %v305
  %v307 = vpop.f32.mrf.mxu0
  %v308 = vadd.f32 %v64, %v307
  %v309 = vpop.f32.mrf.mxu0
  %v310 = vadd.f32 %v60, %v309
  %v311 = vpop.f32.mrf.mxu0
  %v312 = vadd.f32 %v64, %v311
  %313 = vmatprep.mubr.bf16.mxu0 0
  %314 = vmatmul.mubr.bf16.gmra.mxu0 %v95
  %v315 = vpop.f32.mrf.mxu0
  %v316 = vadd.f32 %v60, %v315
  %v317 = vpop.f32.mrf.mxu0
  %v318 = vadd.f32 %v64, %v317
  %v319 = vpop.f32.mrf.mxu0
  %v320 = vadd.f32 %v60, %v319
  %v321 = vpop.f32.mrf.mxu0
  %v322 = vadd.f32 %v64, %v321
  %323 = vmatprep.mubr.bf16.mxu0 0
  %324 = vmatmul.mubr.bf16.gmra.mxu0 %v96
  %v325 = vpop.f32.mrf.mxu0
  %v326 = vadd.f32 %v60, %v325
  %v327 = vpop.f32.mrf.mxu0
  %v328 = vadd.f32 %v64, %v327
  %v329 = vpop.f32.mrf.mxu0
  %v330 = vadd.f32 %v60, %v329
  %v331 = vpop.f32.mrf.mxu0
  %v332 = vadd.f32 %v64, %v331
  %333 = vdwg.mxu0
  %334 = vmatprep.subr.bf16.mxu0 %v228
  %335 = vmatpush1.bf16.msra.mxu0 %v227
  %336 = vmatprep.subr.bf16.mxu0 %v224
  %337 = vmatpush1.bf16.msra.mxu0 %v223
  %338 = vmatprep.subr.bf16.mxu0 %v220
  %339 = vmatpush1.bf16.msra.mxu0 %v219
  %340 = vmatprep.subr.bf16.mxu0 %v216
  %341 = vmatpush1.bf16.msra.mxu0 %v215
  %342 = vmatprep.subr.bf16.mxu0 %v212
  %343 = vmatpush1.bf16.msra.mxu0 %v211
  %344 = vmatprep.subr.bf16.mxu0 %v208
  %345 = vmatpush1.bf16.msra.mxu0 %v207
  %346 = vmatprep.subr.bf16.mxu0 %v204
  %347 = vmatpush1.bf16.msra.mxu0 %v203
  %348 = vmatprep.subr.bf16.mxu0 %v200
  %349 = vmatpush1.bf16.msra.mxu0 %v199
  %350 = vmatprep.subr.bf16.mxu0 0
  %351 = vmatpush2.bf16.msra.mxu0 0
  %352 = vmatprep.subr.bf16.mxu0 0
  %353 = vmatpush2.bf16.msra.mxu0 0
  %354 = vmatprep.subr.bf16.mxu0 0
  %355 = vmatpush2.bf16.msra.mxu0 0
  %356 = vmatprep.subr.bf16.mxu0 0
  %357 = vmatpush2.bf16.msra.mxu0 0
  %358 = vmatprep.subr.bf16.mxu0 0
  %359 = vmatpush2.bf16.msra.mxu0 0
  %360 = vmatprep.subr.bf16.mxu0 0
  %361 = vmatpush2.bf16.msra.mxu0 0
  %362 = vmatprep.subr.bf16.mxu0 0
  %363 = vmatpush2.bf16.msra.mxu0 0
  %364 = vmatprep.subr.bf16.mxu0 0
  %365 = vmatpush2.bf16.msra.mxu0 0
  %366 = vmatprep.mubr.bf16.mxu0 0
  %367 = vmatmul.mubr.bf16.gmra.mxu0 %v93
  %v368 = vpop.f32.mrf.mxu0
  %v369 = vadd.f32 %v68, %v368
  %v370 = vpop.f32.mrf.mxu0
  %v371 = vadd.f32 %v72, %v370
  %v372 = vpop.f32.mrf.mxu0
  %v373 = vadd.f32 %v68, %v372
  %v374 = vpop.f32.mrf.mxu0
  %v375 = vadd.f32 %v72, %v374
  %376 = vmatprep.mubr.bf16.mxu0 0
  %377 = vmatmul.mubr.bf16.gmra.mxu0 %v94
  %v378 = vpop.f32.mrf.mxu0
  %v379 = vadd.f32 %v68, %v378
  %v380 = vpop.f32.mrf.mxu0
  %v381 = vadd.f32 %v72, %v380
  %v382 = vpop.f32.mrf.mxu0
  %v383 = vadd.f32 %v68, %v382
  %v384 = vpop.f32.mrf.mxu0
  %v385 = vadd.f32 %v72, %v384
  %386 = vmatprep.mubr.bf16.mxu0 0
  %387 = vmatmul.mubr.bf16.gmra.mxu0 %v95
  %v388 = vpop.f32.mrf.mxu0
  %v389 = vadd.f32 %v68, %v388
  %v390 = vpop.f32.mrf.mxu0
  %v391 = vadd.f32 %v72, %v390
  %v392 = vpop.f32.mrf.mxu0
  %v393 = vadd.f32 %v68, %v392
  %v394 = vpop.f32.mrf.mxu0
  %v395 = vadd.f32 %v72, %v394
  %396 = vmatprep.mubr.bf16.mxu0 0
  %397 = vmatmul.mubr.bf16.gmra.mxu0 %v96
  %v398 = vpop.f32.mrf.mxu0
  %v399 = vadd.f32 %v68, %v398
  %v400 = vpop.f32.mrf.mxu0
  %v401 = vadd.f32 %v72, %v400
  %v402 = vpop.f32.mrf.mxu0
  %v403 = vadd.f32 %v68, %v402
  %v404 = vpop.f32.mrf.mxu0
  %v405 = vadd.f32 %v72, %v404
  %406 = vdwg.mxu0
  %407 = vst [vmem:[%s3] sm:$0xff] %v296
  %408 = vst [vmem:[%s3 + $0x8] sm:$0xff] %v298
  %409 = vst [vmem:[%s3 + $0x10] sm:$0xff] %v369
  %410 = vst [vmem:[%s3 + $0x18] sm:$0xff] %v371
  %411 = vst [vmem:[%s3 + $0x20] sm:$0xff] %v300
  %412 = vst [vmem:[%s3 + $0x28] sm:$0xff] %v302
  %413 = vst [vmem:[%s3 + $0x30] sm:$0xff] %v373
  %414 = vst [vmem:[%s3 + $0x38] sm:$0xff] %v375
  %415 = vst [vmem:[%s3 + $0x40] sm:$0xff] %v306
  %416 = vst [vmem:[%s3 + $0x48] sm:$0xff] %v308
  %417 = vst [vmem:[%s3 + $0x50] sm:$0xff] %v379
  %418 = vst [vmem:[%s3 + $0x58] sm:$0xff] %v381
  %419 = vst [vmem:[%s3 + $0x60] sm:$0xff] %v310
  %420 = vst [vmem:[%s3 + $0x68] sm:$0xff] %v312
  %421 = vst [vmem:[%s3 + $0x70] sm:$0xff] %v383
  %422 = vst [vmem:[%s3 + $0x78] sm:$0xff] %v385
  %423 = vst [vmem:[%s3 + $0x80] sm:$0xff] %v316
  %424 = vst [vmem:[%s3 + $0x88] sm:$0xff] %v318
  %425 = vst [vmem:[%s3 + $0x90] sm:$0xff] %v389
  %426 = vst [vmem:[%s3 + $0x98] sm:$0xff] %v391
  %427 = vst [vmem:[%s3 + $0xa0] sm:$0xff] %v320
  %428 = vst [vmem:[%s3 + $0xa8] sm:$0xff] %v322
  %429 = vst [vmem:[%s3 + $0xb0] sm:$0xff] %v393
  %430 = vst [vmem:[%s3 + $0xb8] sm:$0xff] %v395
  %431 = vst [vmem:[%s3 + $0xc0] sm:$0xff] %v326
  %432 = vst [vmem:[%s3 + $0xc8] sm:$0xff] %v328
  %433 = vst [vmem:[%s3 + $0xd0] sm:$0xff] %v399
  %434 = vst [vmem:[%s3 + $0xd8] sm:$0xff] %v401
  %435 = vst [vmem:[%s3 + $0xe0] sm:$0xff] %v330
  %436 = vst [vmem:[%s3 + $0xe8] sm:$0xff] %v332
  %437 = vst [vmem:[%s3 + $0xf0] sm:$0xff] %v403
  %438 = vst [vmem:[%s3 + $0xf8] sm:$0xff] %v405
  // Predicated region
  $region14: #{s2s_target_loss.2} parent=0 // pred_check
    _
  $region15: #{s2s_target_loss.2} parent=0 // pred_check_branch
    %440 = sbr.rel (0) target = $region17
  $region16: #{s2s_target_loss.2} parent=0 // pred_region
    _
  $region17: #{s2s_target_loss.2} parent=0 // pred_fallthru
    _
  // Predicated region
  $region18: #{s2s_target_loss.2} parent=0 // pred_check
    _
  $region19: #{s2s_target_loss.2} parent=0 // pred_check_branch
    %442 = sbr.rel (0) target = $region21
  $region20: #{s2s_target_loss.2} parent=0 // pred_region
    _
  $region21: #{s2s_target_loss.2} parent=0 // pred_fallthru
    _

// kernel: s2s_target_loss.3
$region0: #{s2s_target_loss.3}
  #allocation0 [shape = 'u32[]', space=smem, size = 0x4, offset = 0x4, fixed_abs, tag = 'smem constant byte address 0x4 - core index']
  #allocation1 [shape = 'u32[144,128]{1,0:T(1,128)}', space=vmem, size = 0x12000, scoped, tag = 'internal scratch']
  #allocation2 [shape = 'f32[8,128]{1,0:T(8,128)}', space=vmem, size = 0x1000, scoped, tag = 'scratch operand']
  #allocation3 [shape = 'f32[8,128]{1,0:T(8,128)}', space=vmem, size = 0x1000, scoped, tag = 'scratch operand']
  %s0 = inlined_call_operand.vmem [shape: f32[8,8,512], index: 0, kind: input, shape index: {}]
  %s1 = inlined_call_operand.vmem [shape: s32[8,8,1], index: 1, kind: input, shape index: {}]
  %s2 = inlined_call_operand.vmem [shape: f32[8,128], index: 2, kind: input, shape index: {}]
  %s3 = inlined_call_operand.vmem [shape: bf16[128,512], index: 3, kind: input, shape index: {}]
  %s4 = inlined_call_operand.vmem [shape: bf16[128,128], index: 4, kind: input, shape index: {}]
  %s5 = inlined_call_operand.vmem [shape: f32[1,128], index: 5, kind: input, shape index: {}]
  %s6 = inlined_call_operand.vmem [shape: f32[1,8,1], index: 6, kind: output, shape index: {0}]
  %s7 = inlined_call_operand.vmem [shape: f32[1,8,1], index: 7, kind: output, shape index: {1}]
  %s8 = inlined_call_operand.vmem [shape: f32[1,8,1], index: 8, kind: output, shape index: {2}]
  %9 = xla_tuple %s6, %s7, %s8
  %s10 = sld [smem:[#allocation0]]
  $region77: #{s2s_target_loss.3} parent=0
    _
  %s12 = ssub.s32 1, %s10
  %s13 = scalar_select 0, %s12, %s10
  loop: start=0, step=1, limit=10
  $region2: #{s2s_target_loss.3} parent=0 // loop_pre_header
    _
  $region3: #{s2s_target_loss.3} parent=0 // loop_header
    %s15 = sphi 0, %s19
    %p16 = scmp.ge.s32.totalorder %s15, 10
    %s22 = sphi 0, %s34
    %s23 = sphi 0, %s30
    %s24 = sphi 0, %s22
    %s25 = sphi 0, %s23
    %s26 = sphi 0, %s24
    %s27 = sphi 0, %s25
    %s39 = sphi 0, %s41
    %s42 = sphi 0, %s39
    %s43 = sphi 0, %s42
    %s59 = sphi 0, %s43
    %s67 = sphi 0, %s69
    %s70 = sphi 0, %s67
    %s71 = sphi 0, %s70
    %s87 = sphi 0, %s71
    %s93 = sphi 0, %s95
    %s96 = sphi 0, %s93
    %s97 = sphi 0, %s96
    %s113 = sphi 0, %s97
    %s117 = sphi 0, %s117
    %s119 = sphi 0, %s117
    %s120 = sphi 0, %s119
    %s134 = sphi 0, %s120
    %s138 = sphi 0, %s138
    %s140 = sphi 0, %s138
    %s141 = sphi 0, %s140
    %s155 = sphi 0, %s141
    %s159 = sphi 0, %s159
    %s161 = sphi 0, %s159
    %s162 = sphi 0, %s161
    %s176 = sphi 0, %s162
    %s182 = sphi 0, %s184
    %s185 = sphi 0, %s182
    %s186 = sphi 0, %s185
    %s202 = sphi 0, %s186
    %s208 = sphi 0, %s210
    %s211 = sphi 0, %s208
    %s212 = sphi 0, %s211
    %s228 = sphi 0, %s212
    %s234 = sphi 0, %s236
    %s237 = sphi 0, %s234
    %s238 = sphi 0, %s237
    %s254 = sphi 0, %s238
  $region4: #{s2s_target_loss.3} parent=0 // loop_header_branch
    %18 = sbr.rel (%p16) target = $region8
  $region5: #{s2s_target_loss.3} parent=0 // loop_body
    %s20 = ssub.s32 %s15, 1
    %s21 = ssub.s32 %s15, 2
    %s28 = sadd.s32 1, %s23
    %p29 = scmp.ge.s32.totalorder %s28, 8
    %s30 = scalar_select %p29, 0, %s28
    %s31 = sadd.s32 1, %s22
    %s32 = scalar_select %p29, %s31, %s22
    %p33 = scmp.ge.s32.totalorder %s32, 1
    %s34 = scalar_select %p33, 0, %s32
    %s35 = ssub.s32 %s23, %s30
    %s36 = ssub.s32 %s22, %s34
    %s37 = sor.u32 %s35, %s36
    %p38 = scmp.eq.s32.totalorder %s37, 0
    %s40 = sadd.s32 %s39, 1
    %s41 = scalar_select %p38, %s39, %s40
    %p44 = pneg %p38
    %p45 = scmp.eq.s32.totalorder %s15, 7
    %p46 = por %p44, %p45
    %p47 = scmp.ne.s32.totalorder %s39, %s42
    %p48 = scmp.eq.s32.totalorder %s15, 0
    %p49 = por %p47, %p48
    %p50 = scmp.ne.s32.totalorder %s39, %s42
    %p51 = scmp.eq.s32.totalorder %s20, 7
    %p52 = por %p50, %p51
    %p53 = scmp.ne.s32.totalorder %s42, %s43
    %p54 = scmp.eq.s32.totalorder %s20, 0
    %p55 = por %p53, %p54
    %p56 = scmp.ne.s32.totalorder %s42, %s43
    %p57 = scmp.eq.s32.totalorder %s21, 7
    %p58 = por %p56, %p57
    %p60 = scmp.ne.s32.totalorder %s43, %s59
    %p61 = scmp.eq.s32.totalorder %s21, 0
    %p62 = por %p60, %p61
    %s63 = ssub.s32 %s23, %s30
    %s64 = ssub.s32 %s22, %s34
    %s65 = sor.u32 %s63, %s64
    %p66 = scmp.eq.s32.totalorder %s65, 0
    %s68 = sadd.s32 %s67, 1
    %s69 = scalar_select %p66, %s67, %s68
    %p72 = pneg %p66
    %p73 = scmp.eq.s32.totalorder %s15, 7
    %p74 = por %p72, %p73
    %p75 = scmp.ne.s32.totalorder %s67, %s70
    %p76 = scmp.eq.s32.totalorder %s15, 0
    %p77 = por %p75, %p76
    %p78 = scmp.ne.s32.totalorder %s67, %s70
    %p79 = scmp.eq.s32.totalorder %s20, 7
    %p80 = por %p78, %p79
    %p81 = scmp.ne.s32.totalorder %s70, %s71
    %p82 = scmp.eq.s32.totalorder %s20, 0
    %p83 = por %p81, %p82
    %p84 = scmp.ne.s32.totalorder %s70, %s71
    %p85 = scmp.eq.s32.totalorder %s21, 7
    %p86 = por %p84, %p85
    %p88 = scmp.ne.s32.totalorder %s71, %s87
    %p89 = scmp.eq.s32.totalorder %s21, 0
    %p90 = por %p88, %p89
    %s91 = ssub.s32 %s22, %s34
    %p92 = scmp.eq.s32.totalorder %s91, 0
    %s94 = sadd.s32 %s93, 1
    %s95 = scalar_select %p92, %s93, %s94
    %p98 = pneg %p92
    %p99 = scmp.eq.s32.totalorder %s15, 7
    %p100 = por %p98, %p99
    %p101 = scmp.ne.s32.totalorder %s93, %s96
    %p102 = scmp.eq.s32.totalorder %s15, 0
    %p103 = por %p101, %p102
    %p104 = scmp.ne.s32.totalorder %s93, %s96
    %p105 = scmp.eq.s32.totalorder %s20, 7
    %p106 = por %p104, %p105
    %p107 = scmp.ne.s32.totalorder %s96, %s97
    %p108 = scmp.eq.s32.totalorder %s20, 0
    %p109 = por %p107, %p108
    %p110 = scmp.ne.s32.totalorder %s96, %s97
    %p111 = scmp.eq.s32.totalorder %s21, 7
    %p112 = por %p110, %p111
    %p114 = scmp.ne.s32.totalorder %s97, %s113
    %p115 = scmp.eq.s32.totalorder %s21, 0
    %p116 = por %p114, %p115
    %s118 = sadd.s32 %s117, 1
    %p121 = scmp.eq.s32.totalorder %s15, 7
    %p122 = scmp.ne.s32.totalorder %s117, %s119
    %p123 = scmp.eq.s32.totalorder %s15, 0
    %p124 = por %p122, %p123
    %p125 = scmp.ne.s32.totalorder %s117, %s119
    %p126 = scmp.eq.s32.totalorder %s20, 7
    %p127 = por %p125, %p126
    %p128 = scmp.ne.s32.totalorder %s119, %s120
    %p129 = scmp.eq.s32.totalorder %s20, 0
    %p130 = por %p128, %p129
    %p131 = scmp.ne.s32.totalorder %s119, %s120
    %p132 = scmp.eq.s32.totalorder %s21, 7
    %p133 = por %p131, %p132
    %p135 = scmp.ne.s32.totalorder %s120, %s134
    %p136 = scmp.eq.s32.totalorder %s21, 0
    %p137 = por %p135, %p136
    %s139 = sadd.s32 %s138, 1
    %p142 = scmp.eq.s32.totalorder %s15, 7
    %p143 = scmp.ne.s32.totalorder %s138, %s140
    %p144 = scmp.eq.s32.totalorder %s15, 0
    %p145 = por %p143, %p144
    %p146 = scmp.ne.s32.totalorder %s138, %s140
    %p147 = scmp.eq.s32.totalorder %s20, 7
    %p148 = por %p146, %p147
    %p149 = scmp.ne.s32.totalorder %s140, %s141
    %p150 = scmp.eq.s32.totalorder %s20, 0
    %p151 = por %p149, %p150
    %p152 = scmp.ne.s32.totalorder %s140, %s141
    %p153 = scmp.eq.s32.totalorder %s21, 7
    %p154 = por %p152, %p153
    %p156 = scmp.ne.s32.totalorder %s141, %s155
    %p157 = scmp.eq.s32.totalorder %s21, 0
    %p158 = por %p156, %p157
    %s160 = sadd.s32 %s159, 1
    %p163 = scmp.eq.s32.totalorder %s15, 7
    %p164 = scmp.ne.s32.totalorder %s159, %s161
    %p165 = scmp.eq.s32.totalorder %s15, 0
    %p166 = por %p164, %p165
    %p167 = scmp.ne.s32.totalorder %s159, %s161
    %p168 = scmp.eq.s32.totalorder %s20, 7
    %p169 = por %p167, %p168
    %p170 = scmp.ne.s32.totalorder %s161, %s162
    %p171 = scmp.eq.s32.totalorder %s20, 0
    %p172 = por %p170, %p171
    %p173 = scmp.ne.s32.totalorder %s161, %s162
    %p174 = scmp.eq.s32.totalorder %s21, 7
    %p175 = por %p173, %p174
    %p177 = scmp.ne.s32.totalorder %s162, %s176
    %p178 = scmp.eq.s32.totalorder %s21, 0
    %p179 = por %p177, %p178
    %s180 = ssub.s32 %s22, %s34
    %p181 = scmp.eq.s32.totalorder %s180, 0
    %s183 = sadd.s32 %s182, 1
    %s184 = scalar_select %p181, %s182, %s183
    %p187 = pneg %p181
    %p188 = scmp.eq.s32.totalorder %s15, 7
    %p189 = por %p187, %p188
    %p190 = scmp.ne.s32.totalorder %s182, %s185
    %p191 = scmp.eq.s32.totalorder %s15, 0
    %p192 = por %p190, %p191
    %p193 = scmp.ne.s32.totalorder %s182, %s185
    %p194 = scmp.eq.s32.totalorder %s20, 7
    %p195 = por %p193, %p194
    %p196 = scmp.ne.s32.totalorder %s185, %s186
    %p197 = scmp.eq.s32.totalorder %s20, 0
    %p198 = por %p196, %p197
    %p199 = scmp.ne.s32.totalorder %s185, %s186
    %p200 = scmp.eq.s32.totalorder %s21, 7
    %p201 = por %p199, %p200
    %p203 = scmp.ne.s32.totalorder %s186, %s202
    %p204 = scmp.eq.s32.totalorder %s21, 0
    %p205 = por %p203, %p204
    %s206 = ssub.s32 %s22, %s34
    %p207 = scmp.eq.s32.totalorder %s206, 0
    %s209 = sadd.s32 %s208, 1
    %s210 = scalar_select %p207, %s208, %s209
    %p213 = pneg %p207
    %p214 = scmp.eq.s32.totalorder %s15, 7
    %p215 = por %p213, %p214
    %p216 = scmp.ne.s32.totalorder %s208, %s211
    %p217 = scmp.eq.s32.totalorder %s15, 0
    %p218 = por %p216, %p217
    %p219 = scmp.ne.s32.totalorder %s208, %s211
    %p220 = scmp.eq.s32.totalorder %s20, 7
    %p221 = por %p219, %p220
    %p222 = scmp.ne.s32.totalorder %s211, %s212
    %p223 = scmp.eq.s32.totalorder %s20, 0
    %p224 = por %p222, %p223
    %p225 = scmp.ne.s32.totalorder %s211, %s212
    %p226 = scmp.eq.s32.totalorder %s21, 7
    %p227 = por %p225, %p226
    %p229 = scmp.ne.s32.totalorder %s212, %s228
    %p230 = scmp.eq.s32.totalorder %s21, 0
    %p231 = por %p229, %p230
    %s232 = ssub.s32 %s22, %s34
    %p233 = scmp.eq.s32.totalorder %s232, 0
    %s235 = sadd.s32 %s234, 1
    %s236 = scalar_select %p233, %s234, %s235
    %p239 = pneg %p233
    %p240 = scmp.eq.s32.totalorder %s15, 7
    %p241 = por %p239, %p240
    %p242 = scmp.ne.s32.totalorder %s234, %s237
    %p243 = scmp.eq.s32.totalorder %s15, 0
    %p244 = por %p242, %p243
    %p245 = scmp.ne.s32.totalorder %s234, %s237
    %p246 = scmp.eq.s32.totalorder %s20, 7
    %p247 = por %p245, %p246
    %p248 = scmp.ne.s32.totalorder %s237, %s238
    %p249 = scmp.eq.s32.totalorder %s20, 0
    %p250 = por %p248, %p249
    %p251 = scmp.ne.s32.totalorder %s237, %s238
    %p252 = scmp.eq.s32.totalorder %s21, 7
    %p253 = por %p251, %p252
    %p255 = scmp.ne.s32.totalorder %s238, %s254
    %p256 = scmp.eq.s32.totalorder %s21, 0
    %p257 = por %p255, %p256
    %p258 = scmp.le.s32.totalorder 1, %s15
    %p259 = scmp.lt.s32.totalorder %s15, 9
    %p260 = pnand %p258, %p259
    %p261 = pneg %p260
    // Predicated region
    $region9: #{s2s_target_loss.3} parent=5 // pred_check
      _
    $region10: #{s2s_target_loss.3} parent=5 // pred_check_branch
      %263 = sbr.rel (%p260) target = $region12
    $region11: #{s2s_target_loss.3} parent=5 // pred_region
      %s264 = ssub.s32 %s15, 1
      // Predicated region
      $region13: #{s2s_target_loss.3} parent=11 // pred_check
        %p265 = pneg %p109
      $region14: #{s2s_target_loss.3} parent=11 // pred_check_branch
        %267 = sbr.rel (%p265) target = $region16
      $region15: #{s2s_target_loss.3} parent=11 // pred_region
        %p268 = scmp.lt.s32.totalorder %s24, 0
        %s269 = scalar_select %p268, %s24, 0
        %s270 = smul.addr %s269, 8
        %s271 = scalar_lea.vmem %s2, %s270
      $region16: #{s2s_target_loss.3} parent=11 // pred_fallthru
        _
      // Predicated region
      $region17: #{s2s_target_loss.3} parent=11 // pred_check
        %p272 = pneg %p130
      $region18: #{s2s_target_loss.3} parent=11 // pred_check_branch
        %274 = sbr.rel (%p272) target = $region20
      $region19: #{s2s_target_loss.3} parent=11 // pred_region
        _
      $region20: #{s2s_target_loss.3} parent=11 // pred_fallthru
        _
      // Predicated region
      $region21: #{s2s_target_loss.3} parent=11 // pred_check
        %p275 = pneg %p151
      $region22: #{s2s_target_loss.3} parent=11 // pred_check_branch
        %277 = sbr.rel (%p275) target = $region24
      $region23: #{s2s_target_loss.3} parent=11 // pred_region
        _
      $region24: #{s2s_target_loss.3} parent=11 // pred_fallthru
        _
      // Predicated region
      $region25: #{s2s_target_loss.3} parent=11 // pred_check
        %p278 = pneg %p172
      $region26: #{s2s_target_loss.3} parent=11 // pred_check_branch
        %280 = sbr.rel (%p278) target = $region28
      $region27: #{s2s_target_loss.3} parent=11 // pred_region
        _
      $region28: #{s2s_target_loss.3} parent=11 // pred_fallthru
        _
    $region12: #{s2s_target_loss.3} parent=5 // pred_fallthru
      _
    %p281 = scmp.lt.s32.totalorder %s15, 8
    // Predicated region
    $region29: #{s2s_target_loss.3} parent=5 // pred_check
      %p282 = pneg %p281
    $region30: #{s2s_target_loss.3} parent=5 // pred_check_branch
      %284 = sbr.rel (%p282) target = $region32
    $region31: #{s2s_target_loss.3} parent=5 // pred_region
      // Predicated region
      $region33: #{s2s_target_loss.3} parent=31 // pred_check
        %p285 = pneg %p49
      $region34: #{s2s_target_loss.3} parent=31 // pred_check_branch
        %287 = sbr.rel (%p285) target = $region36
      $region35: #{s2s_target_loss.3} parent=31 // pred_region
        %p288 = scmp.lt.s32.totalorder %s23, 7
        %s289 = scalar_select %p288, %s23, 7
        %p290 = scmp.lt.s32.totalorder %s22, 0
        %s291 = scalar_select %p290, %s22, 0
        %s292 = smul.addr %s291, 4
        %s293 = smul.addr %s289, 4
        %s294 = sadd.s32 %s292, %s293
        %s295 = smul.addr %s294, 8
        %s296 = scalar_lea.vmem %s0, %s295
      $region36: #{s2s_target_loss.3} parent=31 // pred_fallthru
        _
      // Predicated region
      $region37: #{s2s_target_loss.3} parent=31 // pred_check
        %p297 = pneg %p77
      $region38: #{s2s_target_loss.3} parent=31 // pred_check_branch
        %299 = sbr.rel (%p297) target = $region40
      $region39: #{s2s_target_loss.3} parent=31 // pred_region
        %p300 = scmp.lt.s32.totalorder %s23, 7
        %s301 = scalar_select %p300, %s23, 7
        %p302 = scmp.lt.s32.totalorder %s22, 0
        %s303 = scalar_select %p302, %s22, 0
        %s304 = sadd.s32 %s303, %s301
        %s305 = smul.addr %s304, 8
        %s306 = scalar_lea.vmem %s1, %s305
      $region40: #{s2s_target_loss.3} parent=31 // pred_fallthru
        _
    $region32: #{s2s_target_loss.3} parent=5 // pred_fallthru
      _
    %p307 = scmp.le.s32.totalorder 1, %s15
    %p308 = scmp.lt.s32.totalorder %s15, 9
    %p309 = pnand %p307, %p308
    %p310 = pneg %p309
    // Predicated region
    $region41: #{s2s_target_loss.3} parent=5 // pred_check
      _
    $region42: #{s2s_target_loss.3} parent=5 // pred_check_branch
      %312 = sbr.rel (%p309) target = $region44
    $region43: #{s2s_target_loss.3} parent=5 // pred_region
      %s313 = ssub.s32 %s15, 1
      %p314 = scmp.lt.s32.totalorder %s25, 7
      %s315 = scalar_select %p314, %s25, 7
      %p316 = scmp.lt.s32.totalorder %s24, 0
      %s317 = scalar_select %p316, %s24, 0
      %s318 = smul.addr %s317, 4
      %s319 = smul.addr %s315, 4
      %s320 = sadd.s32 %s318, %s319
      %s321 = smul.addr %s320, 8
      %s322 = scalar_lea.vmem %s0, %s321
      %p323 = pneg %p55
      %p324 = pneg %p52
      %p325 = scmp.lt.s32.totalorder %s25, 7
      %s326 = scalar_select %p325, %s25, 7
      %p327 = scmp.lt.s32.totalorder %s24, 0
      %s328 = scalar_select %p327, %s24, 0
      %s329 = sadd.s32 %s328, %s326
      %s330 = smul.addr %s329, 8
      %s331 = scalar_lea.vmem %s1, %s330
      %p332 = pneg %p83
      %p333 = pneg %p80
      %p334 = scmp.lt.s32.totalorder %s24, 0
      %s335 = scalar_select %p334, %s24, 0
      %s336 = smul.addr %s335, 8
      %s337 = scalar_lea.vmem %s2, %s336
      %p338 = pneg %p109
      %p339 = pneg %p106
      %p340 = pneg %p130
      %p341 = pneg %p127
      %p342 = pneg %p151
      %p343 = pneg %p148
      %p344 = pneg %p172
      %p345 = pneg %p169
      %p346 = pneg %p198
      %p347 = pneg %p195
      %p348 = scmp.lt.s32.totalorder %s24, 0
      %s349 = scalar_select %p348, %s24, 0
      %s350 = smul.addr %s349, 8
      %s351 = scalar_lea.vmem %s6, %s350
      %p352 = pneg %p224
      %p353 = pneg %p221
      %p354 = scmp.lt.s32.totalorder %s24, 0
      %s355 = scalar_select %p354, %s24, 0
      %s356 = smul.addr %s355, 8
      %s357 = scalar_lea.vmem %s7, %s356
      %p358 = pneg %p250
      %p359 = pneg %p247
      %p360 = scmp.lt.s32.totalorder %s24, 0
      %s361 = scalar_select %p360, %s24, 0
      %s362 = smul.addr %s361, 8
      %s363 = scalar_lea.vmem %s8, %s362
      %p364 = scmp.lt.s32.totalorder %s25, 7
      %s365 = scalar_select %p364, %s25, 7
      %p366 = scmp.lt.s32.totalorder %s24, 0
      %s367 = scalar_select %p366, %s24, 0
      %s368 = smul.addr %s367, 4
      %s369 = smul.addr %s365, 4
      %s370 = sadd.s32 %s368, %s369
      %s371 = smul.addr %s370, 8
      %s372 = scalar_lea.vmem %s0, %s371
      %p373 = scmp.lt.s32.totalorder %s25, 7
      %s374 = scalar_select %p373, %s25, 7
      %p375 = scmp.lt.s32.totalorder %s24, 0
      %s376 = scalar_select %p375, %s24, 0
      %s377 = sadd.s32 %s376, %s374
      %s378 = smul.addr %s377, 8
      %s379 = scalar_lea.vmem %s1, %s378
      %p380 = scmp.lt.s32.totalorder %s24, 0
      %s381 = scalar_select %p380, %s24, 0
      %s382 = smul.addr %s381, 8
      %s383 = scalar_lea.vmem %s2, %s382
      %p384 = scmp.lt.s32.totalorder %s24, 0
      %s385 = scalar_select %p384, %s24, 0
      %s386 = smul.addr %s385, 8
      %s387 = scalar_lea.vmem %s6, %s386
      %p388 = scmp.lt.s32.totalorder %s24, 0
      %s389 = scalar_select %p388, %s24, 0
      %s390 = smul.addr %s389, 8
      %s391 = scalar_lea.vmem %s7, %s390
      %p392 = scmp.lt.s32.totalorder %s24, 0
      %s393 = scalar_select %p392, %s24, 0
      %s394 = smul.addr %s393, 8
      %s395 = scalar_lea.vmem %s8, %s394
      %p397 = scmp.eq.s32.totalorder %s25, 0
      // Predicated region
      $region45: #{s2s_target_loss.3} parent=43 // pred_check
        %p398 = pneg %p397
      $region46: #{s2s_target_loss.3} parent=43 // pred_check_branch
        %400 = sbr.rel (%p398) target = $region48
      $region47: #{s2s_target_loss.3} parent=43 // pred_region
        %v401 = vld [vmem:[%s383] sm:$0xff]
        %402 = vst [vmem:[#allocation2] sm:$0xff] %v401
        %v403 = vld [vmem:[%s383] sm:$0xff]
        %404 = vst [vmem:[#allocation3] sm:$0xff] %v403
        %vm405 = vcmask 7168
        %406 = vst.msk [vmem:[%s387] sm:$0xff] %vm405, 0.0
        %407 = vst.msk [vmem:[%s391] sm:$0xff] %vm405, 0.0
        %408 = vst.msk [vmem:[%s395] sm:$0xff] %vm405, 0.0
      $region48: #{s2s_target_loss.3} parent=43 // pred_fallthru
        _
      %v409 = vld [vmem:[#allocation2] sm:$0xff]
      %v410 = vld [vmem:[#allocation3] sm:$0xff]
      %v411 = vld [vmem:[%s372] sm:$0xff]
      %v412 = vld [vmem:[%s372 + $0x8] sm:$0xff]
      %v413 = vld [vmem:[%s372 + $0x10] sm:$0xff]
      %v414 = vld [vmem:[%s372 + $0x18] sm:$0xff]
      %v415 = vpack.c.bf16 %v409, %v409
      %v416 = vld [vmem:[%s3] sm:$0xff]
      %v417 = vld [vmem:[%s3 + $0x8] sm:$0xff]
      %v418 = vld [vmem:[%s3 + $0x10] sm:$0xff]
      %v419 = vld [vmem:[%s3 + $0x18] sm:$0xff]
      %v420 = vld [vmem:[%s3 + $0x20] sm:$0xff]
      %v421 = vld [vmem:[%s3 + $0x28] sm:$0xff]
      %v422 = vld [vmem:[%s3 + $0x30] sm:$0xff]
      %v423 = vld [vmem:[%s3 + $0x38] sm:$0xff]
      %v424 = vld [vmem:[%s3 + $0x40] sm:$0xff]
      %v425 = vld [vmem:[%s3 + $0x48] sm:$0xff]
      %v426 = vld [vmem:[%s3 + $0x50] sm:$0xff]
      %v427 = vld [vmem:[%s3 + $0x58] sm:$0xff]
      %v428 = vld [vmem:[%s3 + $0x60] sm:$0xff]
      %v429 = vld [vmem:[%s3 + $0x68] sm:$0xff]
      %v430 = vld [vmem:[%s3 + $0x70] sm:$0xff]
      %v431 = vld [vmem:[%s3 + $0x78] sm:$0xff]
      %v432 = vld [vmem:[%s3 + $0x80] sm:$0xff]
      %v433 = vld [vmem:[%s3 + $0x88] sm:$0xff]
      %v434 = vld [vmem:[%s3 + $0x90] sm:$0xff]
      %v435 = vld [vmem:[%s3 + $0x98] sm:$0xff]
      %v436 = vld [vmem:[%s3 + $0xa0] sm:$0xff]
      %v437 = vld [vmem:[%s3 + $0xa8] sm:$0xff]
      %v438 = vld [vmem:[%s3 + $0xb0] sm:$0xff]
      %v439 = vld [vmem:[%s3 + $0xb8] sm:$0xff]
      %v440 = vld [vmem:[%s3 + $0xc0] sm:$0xff]
      %v441 = vld [vmem:[%s3 + $0xc8] sm:$0xff]
      %v442 = vld [vmem:[%s3 + $0xd0] sm:$0xff]
      %v443 = vld [vmem:[%s3 + $0xd8] sm:$0xff]
      %v444 = vld [vmem:[%s3 + $0xe0] sm:$0xff]
      %v445 = vld [vmem:[%s3 + $0xe8] sm:$0xff]
      %v446 = vld [vmem:[%s3 + $0xf0] sm:$0xff]
      %v447 = vld [vmem:[%s3 + $0xf8] sm:$0xff]
      %v480 = vunpack.c.l.b16 %v416
      %v481 = vunpack.c.h.b16 %v416
      %v482 = vunpack.c.l.b16 %v417
      %v483 = vunpack.c.h.b16 %v417
      %v484 = vunpack.c.l.b16 %v418
      %v485 = vunpack.c.h.b16 %v418
      %v486 = vunpack.c.l.b16 %v419
      %v487 = vunpack.c.h.b16 %v419
      %v488 = vunpack.c.l.b16 %v420
      %v489 = vunpack.c.h.b16 %v420
      %v490 = vunpack.c.l.b16 %v421
      %v491 = vunpack.c.h.b16 %v421
      %v492 = vunpack.c.l.b16 %v422
      %v493 = vunpack.c.h.b16 %v422
      %v494 = vunpack.c.l.b16 %v423
      %v495 = vunpack.c.h.b16 %v423
      %v496 = vunpack.c.l.b16 %v424
      %v497 = vunpack.c.h.b16 %v424
      %v498 = vunpack.c.l.b16 %v425
      %v499 = vunpack.c.h.b16 %v425
      %v500 = vunpack.c.l.b16 %v426
      %v501 = vunpack.c.h.b16 %v426
      %v502 = vunpack.c.l.b16 %v427
      %v503 = vunpack.c.h.b16 %v427
      %v504 = vunpack.c.l.b16 %v428
      %v505 = vunpack.c.h.b16 %v428
      %v506 = vunpack.c.l.b16 %v429
      %v507 = vunpack.c.h.b16 %v429
      %v508 = vunpack.c.l.b16 %v430
      %v509 = vunpack.c.h.b16 %v430
      %v510 = vunpack.c.l.b16 %v431
      %v511 = vunpack.c.h.b16 %v431
      %v512 = vunpack.c.l.b16 %v432
      %v513 = vunpack.c.h.b16 %v432
      %v514 = vunpack.c.l.b16 %v433
      %v515 = vunpack.c.h.b16 %v433
      %v516 = vunpack.c.l.b16 %v434
      %v517 = vunpack.c.h.b16 %v434
      %v518 = vunpack.c.l.b16 %v435
      %v519 = vunpack.c.h.b16 %v435
      %v520 = vunpack.c.l.b16 %v436
      %v521 = vunpack.c.h.b16 %v436
      %v522 = vunpack.c.l.b16 %v437
      %v523 = vunpack.c.h.b16 %v437
      %v524 = vunpack.c.l.b16 %v438
      %v525 = vunpack.c.h.b16 %v438
      %v526 = vunpack.c.l.b16 %v439
      %v527 = vunpack.c.h.b16 %v439
      %v528 = vunpack.c.l.b16 %v440
      %v529 = vunpack.c.h.b16 %v440
      %v530 = vunpack.c.l.b16 %v441
      %v531 = vunpack.c.h.b16 %v441
      %v532 = vunpack.c.l.b16 %v442
      %v533 = vunpack.c.h.b16 %v442
      %v534 = vunpack.c.l.b16 %v443
      %v535 = vunpack.c.h.b16 %v443
      %v536 = vunpack.c.l.b16 %v444
      %v537 = vunpack.c.h.b16 %v444
      %v538 = vunpack.c.l.b16 %v445
      %v539 = vunpack.c.h.b16 %v445
      %v540 = vunpack.c.l.b16 %v446
      %v541 = vunpack.c.h.b16 %v446
      %v542 = vunpack.c.l.b16 %v447
      %v543 = vunpack.c.h.b16 %v447
      %v544 = vpack.c.b16 %v484, %v480
      %v545 = vpack.c.b16 %v485, %v481
      %v546 = vpack.c.b16 %v486, %v482
      %v547 = vpack.c.b16 %v487, %v483
      %v548 = vpack.c.b16 %v492, %v488
      %v549 = vpack.c.b16 %v493, %v489
      %v550 = vpack.c.b16 %v494, %v490
      %v551 = vpack.c.b16 %v495, %v491
      %v552 = vpack.c.b16 %v500, %v496
      %v553 = vpack.c.b16 %v501, %v497
      %v554 = vpack.c.b16 %v502, %v498
      %v555 = vpack.c.b16 %v503, %v499
      %v556 = vpack.c.b16 %v508, %v504
      %v557 = vpack.c.b16 %v509, %v505
      %v558 = vpack.c.b16 %v510, %v506
      %v559 = vpack.c.b16 %v511, %v507
      %v560 = vpack.c.b16 %v516, %v512
      %v561 = vpack.c.b16 %v517, %v513
      %v562 = vpack.c.b16 %v518, %v514
      %v563 = vpack.c.b16 %v519, %v515
      %v564 = vpack.c.b16 %v524, %v520
      %v565 = vpack.c.b16 %v525, %v521
      %v566 = vpack.c.b16 %v526, %v522
      %v567 = vpack.c.b16 %v527, %v523
      %v568 = vpack.c.b16 %v532, %v528
      %v569 = vpack.c.b16 %v533, %v529
      %v570 = vpack.c.b16 %v534, %v530
      %v571 = vpack.c.b16 %v535, %v531
      %v572 = vpack.c.b16 %v540, %v536
      %v573 = vpack.c.b16 %v541, %v537
      %v574 = vpack.c.b16 %v542, %v538
      %v575 = vpack.c.b16 %v543, %v539
      %608 = vmatprep.subr.bf16.mxu0 %v573
      %609 = vmatpush1.bf16.msra.mxu0 %v572
      %610 = vmatprep.subr.bf16.mxu0 %v569
      %611 = vmatpush1.bf16.msra.mxu0 %v568
      %612 = vmatprep.subr.bf16.mxu0 %v565
      %613 = vmatpush1.bf16.msra.mxu0 %v564
      %614 = vmatprep.subr.bf16.mxu0 %v561
      %615 = vmatpush1.bf16.msra.mxu0 %v560
      %616 = vmatprep.subr.bf16.mxu0 %v557
      %617 = vmatpush1.bf16.msra.mxu0 %v556
      %618 = vmatprep.subr.bf16.mxu0 %v553
      %619 = vmatpush1.bf16.msra.mxu0 %v552
      %620 = vmatprep.subr.bf16.mxu0 %v549
      %621 = vmatpush1.bf16.msra.mxu0 %v548
      %622 = vmatprep.subr.bf16.mxu0 %v545
      %623 = vmatpush1.bf16.msra.mxu0 %v544
      %624 = vmatprep.subr.bf16.mxu0 0
      %625 = vmatpush2.bf16.msra.mxu0 0
      %626 = vmatprep.subr.bf16.mxu0 0
      %627 = vmatpush2.bf16.msra.mxu0 0
      %628 = vmatprep.subr.bf16.mxu0 0
      %629 = vmatpush2.bf16.msra.mxu0 0
      %630 = vmatprep.subr.bf16.mxu0 0
      %631 = vmatpush2.bf16.msra.mxu0 0
      %632 = vmatprep.subr.bf16.mxu0 0
      %633 = vmatpush2.bf16.msra.mxu0 0
      %634 = vmatprep.subr.bf16.mxu0 0
      %635 = vmatpush2.bf16.msra.mxu0 0
      %636 = vmatprep.subr.bf16.mxu0 0
      %637 = vmatpush2.bf16.msra.mxu0 0
      %638 = vmatprep.subr.bf16.mxu0 0
      %639 = vmatpush2.bf16.msra.mxu0 0
      %640 = vmatprep.mubr.bf16.mxu0 0
      %641 = vmatmul.mubr.bf16.gmra.mxu0 %v415
      %v642 = vpop.f32.mrf.mxu0
      %v643 = vadd.f32 0.0, %v642
      %v644 = vpop.f32.mrf.mxu0
      %v645 = vadd.f32 0.0, %v644
      %v646 = vpop.f32.mrf.mxu0
      %v647 = vpop.f32.mrf.mxu0
      %648 = vdwg.mxu0
      %649 = vmatprep.subr.bf16.mxu0 %v575
      %650 = vmatpush1.bf16.msra.mxu0 %v574
      %651 = vmatprep.subr.bf16.mxu0 %v571
      %652 = vmatpush1.bf16.msra.mxu0 %v570
      %653 = vmatprep.subr.bf16.mxu0 %v567
      %654 = vmatpush1.bf16.msra.mxu0 %v566
      %655 = vmatprep.subr.bf16.mxu0 %v563
      %656 = vmatpush1.bf16.msra.mxu0 %v562
      %657 = vmatprep.subr.bf16.mxu0 %v559
      %658 = vmatpush1.bf16.msra.mxu0 %v558
      %659 = vmatprep.subr.bf16.mxu0 %v555
      %660 = vmatpush1.bf16.msra.mxu0 %v554
      %661 = vmatprep.subr.bf16.mxu0 %v551
      %662 = vmatpush1.bf16.msra.mxu0 %v550
      %663 = vmatprep.subr.bf16.mxu0 %v547
      %664 = vmatpush1.bf16.msra.mxu0 %v546
      %665 = vmatprep.subr.bf16.mxu0 0
      %666 = vmatpush2.bf16.msra.mxu0 0
      %667 = vmatprep.subr.bf16.mxu0 0
      %668 = vmatpush2.bf16.msra.mxu0 0
      %669 = vmatprep.subr.bf16.mxu0 0
      %670 = vmatpush2.bf16.msra.mxu0 0
      %671 = vmatprep.subr.bf16.mxu0 0
      %672 = vmatpush2.bf16.msra.mxu0 0
      %673 = vmatprep.subr.bf16.mxu0 0
      %674 = vmatpush2.bf16.msra.mxu0 0
      %675 = vmatprep.subr.bf16.mxu0 0
      %676 = vmatpush2.bf16.msra.mxu0 0
      %677 = vmatprep.subr.bf16.mxu0 0
      %678 = vmatpush2.bf16.msra.mxu0 0
      %679 = vmatprep.subr.bf16.mxu0 0
      %680 = vmatpush2.bf16.msra.mxu0 0
      %681 = vmatprep.mubr.bf16.mxu0 0
      %682 = vmatmul.mubr.bf16.gmra.mxu0 %v415
      %v683 = vpop.f32.mrf.mxu0
      %v684 = vadd.f32 0.0, %v683
      %v685 = vpop.f32.mrf.mxu0
      %v686 = vadd.f32 0.0, %v685
      %v687 = vpop.f32.mrf.mxu0
      %v688 = vpop.f32.mrf.mxu0
      %689 = vdwg.mxu0
      %v690 = vadd.f32 %v411, %v643
      %v691 = vadd.f32 %v412, %v645
      %v692 = vadd.f32 %v413, %v684
      %v693 = vadd.f32 %v414, %v686
      %v694 = vxor.u32 %v690, 2147483648
      %v695 = vmul.f32 %v694, 1.442695
      %v696 = vpow.pop %v695
      %v697 = vadd.f32 %v696, 1.0
      %v698 = vrcp.pop %v697
      %v699 = vmul.f32 1.0, %v698
      %v700 = vxor.u32 %v691, 2147483648
      %v701 = vmul.f32 %v700, 1.442695
      %v702 = vpow.pop %v701
      %v703 = vadd.f32 %v702, 1.0
      %v704 = vrcp.pop %v703
      %v705 = vmul.f32 1.0, %v704
      %v706 = vtanh.pop %v692
      %v707 = vxor.u32 %v693, 2147483648
      %v708 = vmul.f32 %v707, 1.442695
      %v709 = vpow.pop %v708
      %v710 = vadd.f32 %v709, 1.0
      %v711 = vrcp.pop %v710
      %v712 = vmul.f32 1.0, %v711
      %v713 = vmul.f32 %v705, %v410
      %v714 = vmul.f32 %v699, %v706
      %v715 = vadd.f32 %v713, %v714
      %v716 = vtanh.pop %v715
      %v717 = vmul.f32 %v712, %v716
      %718 = vst [vmem:[#allocation2] sm:$0xff] %v717
      %719 = vst [vmem:[#allocation3] sm:$0xff] %v715
      %v720 = vpack.c.bf16 %v717, %v717
      %v721 = vld [vmem:[%s4] sm:$0xf]
      %v722 = vld [vmem:[%s4 + $0x4] sm:$0xf]
      %v723 = vld [vmem:[%s4 + $0x8] sm:$0xf]
      %v724 = vld [vmem:[%s4 + $0xc] sm:$0xf]
      %v725 = vld [vmem:[%s4 + $0x10] sm:$0xf]
      %v726 = vld [vmem:[%s4 + $0x14] sm:$0xf]
      %v727 = vld [vmem:[%s4 + $0x18] sm:$0xf]
      %v728 = vld [vmem:[%s4 + $0x1c] sm:$0xf]
      %v729 = vld [vmem:[%s4 + $0x20] sm:$0xf]
      %v730 = vld [vmem:[%s4 + $0x24] sm:$0xf]
      %v731 = vld [vmem:[%s4 + $0x28] sm:$0xf]
      %v732 = vld [vmem:[%s4 + $0x2c] sm:$0xf]
      %v733 = vld [vmem:[%s4 + $0x30] sm:$0xf]
      %v734 = vld [vmem:[%s4 + $0x34] sm:$0xf]
      %v735 = vld [vmem:[%s4 + $0x38] sm:$0xf]
      %v736 = vld [vmem:[%s4 + $0x3c] sm:$0xf]
      %v737 = vld [vmem:[%s5] sm:$0x1]
      %v739 = vlaneseq
      %v740 = vshrl.u32 %v739, 7
      %v741 = vsub.s32 0, %v740
      %v742 = vrot.slane %v737, %v741
      %v760 = vunpack.c.l.b16 %v721
      %v761 = vunpack.c.l.b16 %v722
      %v762 = vunpack.c.l.b16 %v723
      %v763 = vunpack.c.l.b16 %v724
      %v764 = vunpack.c.l.b16 %v725
      %v765 = vunpack.c.l.b16 %v726
      %v766 = vunpack.c.l.b16 %v727
      %v767 = vunpack.c.l.b16 %v728
      %v768 = vunpack.c.l.b16 %v729
      %v769 = vunpack.c.l.b16 %v730
      %v770 = vunpack.c.l.b16 %v731
      %v771 = vunpack.c.l.b16 %v732
      %v772 = vunpack.c.l.b16 %v733
      %v773 = vunpack.c.l.b16 %v734
      %v774 = vunpack.c.l.b16 %v735
      %v775 = vunpack.c.l.b16 %v736
      %v776 = vpack.c.b16 %v761, %v760
      %v777 = vpack.c.b16 %v763, %v762
      %v778 = vpack.c.b16 %v765, %v764
      %v779 = vpack.c.b16 %v767, %v766
      %v780 = vpack.c.b16 %v769, %v768
      %v781 = vpack.c.b16 %v771, %v770
      %v782 = vpack.c.b16 %v773, %v772
      %v783 = vpack.c.b16 %v775, %v774
      %792 = vmatprep.subr.bf16.mxu0 0
      %793 = vmatpush1.bf16.msra.mxu0 %v783
      %794 = vmatprep.subr.bf16.mxu0 0
      %795 = vmatpush1.bf16.msra.mxu0 %v782
      %796 = vmatprep.subr.bf16.mxu0 0
      %797 = vmatpush1.bf16.msra.mxu0 %v781
      %798 = vmatprep.subr.bf16.mxu0 0
      %799 = vmatpush1.bf16.msra.mxu0 %v780
      %800 = vmatprep.subr.bf16.mxu0 0
      %801 = vmatpush1.bf16.msra.mxu0 %v779
      %802 = vmatprep.subr.bf16.mxu0 0
      %803 = vmatpush1.bf16.msra.mxu0 %v778
      %804 = vmatprep.subr.bf16.mxu0 0
      %805 = vmatpush1.bf16.msra.mxu0 %v777
      %806 = vmatprep.subr.bf16.mxu0 0
      %807 = vmatpush1.bf16.msra.mxu0 %v776
      %808 = vmatprep.subr.bf16.mxu0 0
      %809 = vmatpush2.bf16.msra.mxu0 0
      %810 = vmatprep.subr.bf16.mxu0 0
      %811 = vmatpush2.bf16.msra.mxu0 0
      %812 = vmatprep.subr.bf16.mxu0 0
      %813 = vmatpush2.bf16.msra.mxu0 0
      %814 = vmatprep.subr.bf16.mxu0 0
      %815 = vmatpush2.bf16.msra.mxu0 0
      %816 = vmatprep.subr.bf16.mxu0 0
      %817 = vmatpush2.bf16.msra.mxu0 0
      %818 = vmatprep.subr.bf16.mxu0 0
      %819 = vmatpush2.bf16.msra.mxu0 0
      %820 = vmatprep.subr.bf16.mxu0 0
      %821 = vmatpush2.bf16.msra.mxu0 0
      %822 = vmatprep.subr.bf16.mxu0 0
      %823 = vmatpush2.bf16.msra.mxu0 0
      %824 = vmatprep.mubr.bf16.mxu0 0
      %825 = vmatmul.mubr.bf16.gmra.mxu0 %v720
      %v826 = vpop.f32.mrf.mxu0
      %v827 = vadd.f32 %v742, %v826
      %v828 = vpop.f32.mrf.mxu0
      %v829 = vpop.f32.mrf.mxu0
      %v830 = vpop.f32.mrf.mxu0
      %831 = vdwg.mxu0
      %v832 = vld [vmem:[%s379] sm:$0xff]
      %vm833 = vcmp.gt.s32.totalorder %v832, 0
      %v834 = vsel %vm833, 1, 0
      %v835 = vcvt.s32.f32 %v834
      %v836 = vlaneseq
      %v837 = vand.u32 %v836, 127
      %838 = vset.pattern.permute.xlu0 0
      %839 = vperm.xlu0 %838, %v832
      %v840 = vpop.permute.xlu0 %839
      %vm841 = vcmp.eq.s32.totalorder %v837, %v840
      %842 = vmax.xlane.f32.xlu0 %v827
      %v843 = vpop.xlane.xlu0 %842
      %v844 = vsub.f32 %v827, %v843
      %v845 = vmul.f32 %v844, 1.442695
      %v846 = vpow.pop %v845
      %847 = vadd.xlane.f32.xlu0 %v846
      %v848 = vpop.xlane.xlu0 %847
      %v849 = vlog2.pop %v848
      %v850 = vmul.f32 %v849, 0.6931472
      %v851 = vadd.f32 %v843, %v850
      %v852 = vsel %vm841, %v827, 0.0
      %853 = vadd.xlane.f32.xlu0 %v852
      %v854 = vpop.xlane.xlu0 %853
      %v855 = vsub.f32 %v851, %v854
      %vm856 = vcmp.eq.f32.partialorder %v827, %v843
      %v857 = vsel %vm856, %v837, 128
      %v858 = vand.u32 %v857, 65535
      %v859 = vshra.s32 %v857, 16
      %v860 = vcvt.s32.f32 %v858
      %v861 = vcvt.s32.f32 %v859
      %862 = vmin.xlane.f32.xlu0 %v861
      %v863 = vpop.xlane.xlu0 %862
      %vm864 = vcmp.eq.f32.partialorder %v861, %v863
      %v865 = vsel %vm864, %v860, inf
      %866 = vmin.xlane.f32.xlu0 %v865
      %v867 = vpop.xlane.xlu0 %866
      %v868 = vcvt.f32.s32 %v867
      %v869 = vcvt.f32.s32 %v863
      %v870 = vshll.u32 %v869, 16
      %v871 = vadd.s32 %v870, %v868
      %vm872 = vcmp.eq.s32.totalorder %v871, %v832
      %v873 = vsel %vm872, 1, 0
      %v874 = vcvt.s32.f32 %v873
      %v875 = vld [vmem:[%s387] sm:$0xff]
      %v876 = vmul.f32 %v835, %v855
      %v877 = vadd.f32 %v875, %v876
      %vm878 = vcmask 7168
      %879 = vst.msk [vmem:[%s387] sm:$0xff] %vm878, %v877
      %v880 = vld [vmem:[%s391] sm:$0xff]
      %v881 = vmul.f32 %v835, %v874
      %v882 = vadd.f32 %v880, %v881
      %883 = vst.msk [vmem:[%s391] sm:$0xff] %vm878, %v882
      %v884 = vld [vmem:[%s395] sm:$0xff]
      %v885 = vadd.f32 %v884, %v835
      %886 = vst.msk [vmem:[%s395] sm:$0xff] %vm878, %v885
      %p887 = scmp.lt.s32.totalorder %s24, 0
      %s888 = scalar_select %p887, %s24, 0
      %s889 = smul.addr %s888, 8
      %s890 = scalar_lea.vmem %s6, %s889
      %p891 = scmp.lt.s32.totalorder %s24, 0
      %s892 = scalar_select %p891, %s24, 0
      %s893 = smul.addr %s892, 8
      %s894 = scalar_lea.vmem %s7, %s893
      %p895 = scmp.lt.s32.totalorder %s24, 0
      %s896 = scalar_select %p895, %s24, 0
      %s897 = smul.addr %s896, 8
      %s898 = scalar_lea.vmem %s8, %s897
      // Predicated region
      $region49: #{s2s_target_loss.3} parent=43 // pred_check
        %p899 = pneg %p195
      $region50: #{s2s_target_loss.3} parent=43 // pred_check_branch
        %901 = sbr.rel (%p899) target = $region52
      $region51: #{s2s_target_loss.3} parent=43 // pred_region
        _
      $region52: #{s2s_target_loss.3} parent=43 // pred_fallthru
        _
      // Predicated region
      $region53: #{s2s_target_loss.3} parent=43 // pred_check
        %p902 = pneg %p221
      $region54: #{s2s_target_loss.3} parent=43 // pred_check_branch
        %904 = sbr.rel (%p902) target = $region56
      $region55: #{s2s_target_loss.3} parent=43 // pred_region
        _
      $region56: #{s2s_target_loss.3} parent=43 // pred_fallthru
        _
      // Predicated region
      $region57: #{s2s_target_loss.3} parent=43 // pred_check
        %p905 = pneg %p247
      $region58: #{s2s_target_loss.3} parent=43 // pred_check_branch
        %907 = sbr.rel (%p905) target = $region60
      $region59: #{s2s_target_loss.3} parent=43 // pred_region
        _
      $region60: #{s2s_target_loss.3} parent=43 // pred_fallthru
        _
      // Predicated region
      $region61: #{s2s_target_loss.3} parent=43 // pred_check
        %p908 = pneg %p195
      $region62: #{s2s_target_loss.3} parent=43 // pred_check_branch
        %910 = sbr.rel (%p908) target = $region64
      $region63: #{s2s_target_loss.3} parent=43 // pred_region
        %p911 = scmp.lt.s32.totalorder %s24, 0
        %s912 = scalar_select %p911, %s24, 0
        %s913 = smul.addr %s912, 8
        %s914 = scalar_lea.vmem %s6, %s913
      $region64: #{s2s_target_loss.3} parent=43 // pred_fallthru
        _
      // Predicated region
      $region65: #{s2s_target_loss.3} parent=43 // pred_check
        %p915 = pneg %p221
      $region66: #{s2s_target_loss.3} parent=43 // pred_check_branch
        %917 = sbr.rel (%p915) target = $region68
      $region67: #{s2s_target_loss.3} parent=43 // pred_region
        %p918 = scmp.lt.s32.totalorder %s24, 0
        %s919 = scalar_select %p918, %s24, 0
        %s920 = smul.addr %s919, 8
        %s921 = scalar_lea.vmem %s7, %s920
      $region68: #{s2s_target_loss.3} parent=43 // pred_fallthru
        _
      // Predicated region
      $region69: #{s2s_target_loss.3} parent=43 // pred_check
        %p922 = pneg %p247
      $region70: #{s2s_target_loss.3} parent=43 // pred_check_branch
        %924 = sbr.rel (%p922) target = $region72
      $region71: #{s2s_target_loss.3} parent=43 // pred_region
        %p925 = scmp.lt.s32.totalorder %s24, 0
        %s926 = scalar_select %p925, %s24, 0
        %s927 = smul.addr %s926, 8
        %s928 = scalar_lea.vmem %s8, %s927
      $region72: #{s2s_target_loss.3} parent=43 // pred_fallthru
        _
    $region44: #{s2s_target_loss.3} parent=5 // pred_fallthru
      _
    %p929 = scmp.le.s32.totalorder 2, %s15
    // Predicated region
    $region73: #{s2s_target_loss.3} parent=5 // pred_check
      %p930 = pneg %p929
    $region74: #{s2s_target_loss.3} parent=5 // pred_check_branch
      %932 = sbr.rel (%p930) target = $region76
    $region75: #{s2s_target_loss.3} parent=5 // pred_region
      %s933 = ssub.s32 %s15, 2
    $region76: #{s2s_target_loss.3} parent=5 // pred_fallthru
      _
  $region6: #{s2s_target_loss.3} parent=0 // loop_footer
    %s19 = sadd.s32 1, %s15
  $region7: #{s2s_target_loss.3} parent=0 // loop_footer_branch
    %14 = sbr.rel target = $region3
  $region8: #{s2s_target_loss.3} parent=0 // loop_exit
    _

</llo_original>
